<compile_context>
chip_gen: v5e
topology: v5e:2x2
jax: 0.10.0
libtpu: 0.0.40
codegen_flags: <defaults>
</compile_context>

<pallas_src>
import functools
import math

import jax
import jax.numpy as jnp
from jax import lax
from jax.experimental import pallas as pl
from jax.experimental.pallas import tpu as pltpu


# ----------------------------------------------------------------------------
# Fused ML3Layer kernel
# ----------------------------------------------------------------------------

def _ml3_fused_kernel(src_ref,            # (E,)  int32  SMEM (scalar prefetch)
                      dst_ref,            # (1, E) int32
                      ea_ref,             # (E, De) f32
                      x_ref,              # (N, Cin) f32
                      etw123_ref,         # (De, 6*De) bf16   [W1 | W2 | W3]
                      etw4a_ref,          # (2*De, K) bf16    W4 top half
                      etw4b_ref,          # (2*De, K) bf16    W4 bottom half
                      convw_ref,          # (K*Cin, nout1) bf16
                      convb_ref,          # (1, nout1) f32
                      skw_ref,            # (Cin, 2*nout2) bf16  [W1 | W2]
                      skb_ref,            # (1, 2*nout2) f32     [b1 | b2]
                      o_ref,              # (N, nout1+nout2) f32
                      xsrc_ref,           # (E, Cin) f32 VMEM scratch
                      *, n_nodes, n_edges, k_spect, n_ein, nout2):
    bf16 = jnp.bfloat16
    f32 = jnp.float32

    x = x_ref[...]                                   # (N, Cin) f32
    ea_in = ea_ref[...]                              # (E, De)  f32

    # ---- learned edge transform: linear1|2|3 share the LHS -> one MXU push --
    h = jnp.dot(ea_in.astype(bf16), etw123_ref[...], preferred_element_type=f32)
    d2 = 2 * n_ein
    lin = jnp.maximum(h[:, 0:d2], 0.0)
    gate = jnp.tanh(h[:, d2:2 * d2]) * jnp.tanh(h[:, 2 * d2:3 * d2])
    # cat([lin, gate], dim=1) @ W4  ==  lin @ W4[:2De] + gate @ W4[2De:]
    ea = jnp.maximum(
        jnp.dot(lin.astype(bf16), etw4a_ref[...], preferred_element_type=f32)
        + jnp.dot(gate.astype(bf16), etw4b_ref[...], preferred_element_type=f32),
        0.0)                                         # (E, K) f32

    # ---- gather x[src]: O(E*Cin) scalar-indexed row copies ------------------
    # (src indices live in SMEM via scalar prefetch; no (E, N) one-hot.)
    # TODO(synk): for large E, tile edges into blocks and use a rolled loop /
    # DMA gather instead of this static unroll.
    for e in range(n_edges):
        idx = src_ref[e]
        xsrc_ref[pl.ds(e, 1), :] = x_ref[pl.ds(idx, 1), :]
    x_src = xsrc_ref[...]                            # (E, Cin) f32

    # ---- SpectConv messages: K small matmuls fused into ONE dot -------------
    # weighted[e, k*Cin + c] = ea[e, k] * x[src[e], c]
    weighted = jnp.concatenate(
        [ea[:, k:k + 1] * x_src for k in range(k_spect)], axis=1)   # (E, K*Cin)
    msgs = jnp.dot(weighted.astype(bf16), convw_ref[...],
                   preferred_element_type=f32)       # (E, nout1) f32

    # ---- scatter-add over destination nodes (bf16 one-hot on the MXU) -------
    # (duplicate dst edges accumulate, matching PyG 'add' aggregation)
    dst = dst_ref[...]                               # (1, E) int32
    scatter_oh = (lax.broadcasted_iota(jnp.int32, (n_nodes, n_edges), 0) == dst
                  ).astype(bf16)                     # (N, E) bf16 (exact 0/1)
    conv = jnp.dot(scatter_oh, msgs.astype(bf16), preferred_element_type=f32)
    conv = jnp.maximum(conv + convb_ref[...], 0.0)   # relu(conv + bias)

    # ---- gated skip connection: linear1|2 share the LHS -> one MXU push -----
    hs = (jnp.dot(x.astype(bf16), skw_ref[...], preferred_element_type=f32)
          + skb_ref[...])
    skip = jnp.tanh(hs[:, 0:nout2]) * jnp.tanh(hs[:, nout2:2 * nout2])

    # ---- single lane-dense store of cat([conv, skip], dim=1) ----------------
    o_ref[...] = jnp.concatenate([conv, skip], axis=1).astype(o_ref.dtype)


def ml3_layer_forward(params, x, edge_index, edge_attr):
    """Single fused pallas_call implementing ML3Layer.forward."""
    N, Cin = x.shape
    E, De = edge_attr.shape
    K, _, nout1 = params["conv_w"].shape
    nout2 = params["skip_w1"].shape[1]

    src = edge_index[0].astype(jnp.int32)                     # (E,)  -> SMEM
    dst_row = edge_index[1].reshape(1, E).astype(jnp.int32)   # lane-dense row

    def full(*shape):
        n = len(shape)
        # index_map also receives the scalar-prefetch ref -> swallow extras.
        return pl.BlockSpec(shape, lambda *_, n=n: (0,) * n)

    kernel = functools.partial(_ml3_fused_kernel, n_nodes=N, n_edges=E,
                               k_spect=K, n_ein=De, nout2=nout2)

    grid_spec = pltpu.PrefetchScalarGridSpec(
        num_scalar_prefetch=1,            # src indices -> SMEM
        grid=(1,),
        in_specs=[
            full(1, E),                   # dst indices (lane-dense row)
            full(E, De),                  # edge_attr
            full(N, Cin),                 # x
            full(De, 6 * De),             # merged edge-transform W1|W2|W3 (bf16)
            full(2 * De, K),              # edge-transform W4 top   (bf16)
            full(2 * De, K),              # edge-transform W4 bottom (bf16)
            full(K * Cin, nout1),         # SpectConv weight, (k,c)-flattened (bf16)
            full(1, nout1),               # SpectConv bias (f32)
            full(Cin, 2 * nout2),         # merged skip W1|W2 (bf16)
            full(1, 2 * nout2),           # merged skip b1|b2 (f32)
        ],
        out_specs=full(N, nout1 + nout2),
        scratch_shapes=[pltpu.VMEM((E, Cin), jnp.float32)],   # gathered x[src]
    )

    return pl.pallas_call(
        kernel,
        out_shape=jax.ShapeDtypeStruct((N, nout1 + nout2), jnp.float32),
        grid_spec=grid_spec,
        compiler_params=pltpu.CompilerParams(
            dimension_semantics=("arbitrary",),
            vmem_limit_bytes=48 * 1024 * 1024),   # fits v7x's 64 MiB VMEM
    )(src, dst_row, edge_attr, x,
      params["et_w123_b"], params["et_w4a_b"], params["et_w4b_b"],
      params["conv_w_flat_b"], params["conv_b2"],
      params["skip_w12_b"], params["skip_b12"])


# ----------------------------------------------------------------------------
# Parameters & pure-JAX reference
# ----------------------------------------------------------------------------

def glorot_uniform(key, shape):
    fan_in, fan_out = shape[-2], shape[-1]
    limit = math.sqrt(6.0 / (fan_in + fan_out))
    return jax.random.uniform(key, shape, jnp.float32, -limit, limit)


def make_ml3_params(key, nedgeinput, nedgeoutput, ninp, nout1, nout2):
    De, K = nedgeinput, nedgeoutput
    ks = jax.random.split(key, 9)
    p = dict(
        et_w1=glorot_uniform(ks[0], (De, 2 * De)),
        et_w2=glorot_uniform(ks[1], (De, 2 * De)),
        et_w3=glorot_uniform(ks[2], (De, 2 * De)),
        et_w4=glorot_uniform(ks[3], (4 * De, K)),
        conv_w=glorot_uniform(ks[4], (K, ninp, nout1)),   # SpectConv, selfconn=False
        conv_b=jnp.zeros((nout1,), jnp.float32),          # zeros() init
        skip_w1=glorot_uniform(ks[5], (ninp, nout2)),
        skip_b1=jax.random.uniform(ks[6], (nout2,), jnp.float32, -0.1, 0.1),
        skip_w2=glorot_uniform(ks[7], (ninp, nout2)),
        skip_b2=jax.random.uniform(ks[8], (nout2,), jnp.float32, -0.1, 0.1),
    )
    # Kernel-side packed / bf16 weights, hoisted out of the forward path.
    bf16 = jnp.bfloat16
    p["et_w123_b"] = jnp.concatenate(
        [p["et_w1"], p["et_w2"], p["et_w3"]], axis=1).astype(bf16)     # (De, 6De)
    p["et_w4a_b"] = p["et_w4"][:2 * De].astype(bf16)                   # (2De, K)
    p["et_w4b_b"] = p["et_w4"][2 * De:].astype(bf16)                   # (2De, K)
    p["conv_w_flat_b"] = p["conv_w"].reshape(K * ninp, nout1).astype(bf16)
    p["conv_b2"] = p["conv_b"].reshape(1, nout1)
    p["skip_w12_b"] = jnp.concatenate(
        [p["skip_w1"], p["skip_w2"]], axis=1).astype(bf16)             # (Cin, 2*nout2)
    p["skip_b12"] = jnp.concatenate(
        [p["skip_b1"], p["skip_b2"]]).reshape(1, 2 * nout2)
    return p


def ml3_layer_reference(params, x, edge_index, edge_attr):
    """Plain-JAX f32 reference mirroring the PyTorch ML3Layer.forward."""
    lin = jax.nn.relu(edge_attr @ params["et_w1"])
    gate = jnp.tanh(edge_attr @ params["et_w2"]) * jnp.tanh(edge_attr @ params["et_w3"])
    ea = jax.nn.relu(jnp.concatenate([lin, gate], axis=1) @ params["et_w4"])
    src, dst = edge_index[0], edge_index[1]
    N, Cin = x.shape
    K = ea.shape[1]
    out = jnp.zeros((N, params["conv_w"].shape[2]), jnp.float32)
    for k in range(K):
        msg = ea[:, k:k + 1] * x[src]                            # norm.view(-1,1)*x_j
        h = jnp.zeros((N, Cin), jnp.float32).at[dst].add(msg)    # 'add' aggregation
        out = out + h @ params["conv_w"][k]
    conv = jax.nn.relu(out + params["conv_b"])
    skip = (jnp.tanh(x @ params["skip_w1"] + params["skip_b1"])
            * jnp.tanh(x @ params["skip_w2"] + params["skip_b2"]))
    return jnp.concatenate([conv, skip], axis=1)


# ----------------------------------------------------------------------------
# Driver
# ----------------------------------------------------------------------------

if __name__ == "__main__":
    key = jax.random.PRNGKey(0)
    k_x, k_ea, k_src, k_dst, k_p = jax.random.split(key, 5)

    # small graph, shapes consistent with ML3Layer(learnedge=True)
    N, E = 16, 48
    nedgeinput, nedgeoutput = 4, 4      # K = 4 spectral coefficients
    ninp, nout1, nout2 = 8, 16, 2

    x = jax.random.normal(k_x, (N, ninp), jnp.float32)
    edge_attr = jax.random.normal(k_ea, (E, nedgeinput), jnp.float32)
    src = jax.random.randint(k_src, (E,), 0, N, jnp.int32)
    dst = jax.random.randint(k_dst, (E,), 0, N, jnp.int32)
    edge_index = jnp.stack([src, dst], axis=0)          # [2, E] COO

    params = make_ml3_params(k_p, nedgeinput, nedgeoutput, ninp, nout1, nout2)

    out = ml3_layer_forward(params, x, edge_index, edge_attr)
    out = jax.block_until_ready(out)
    assert out.shape == (N, nout1 + nout2)
    assert bool(jnp.all(jnp.isfinite(out)))

    # Reference is pure f32; the kernel feeds bf16 operands to the MXU with
    # f32 accumulation, so tolerances are loosened accordingly.
    ref = ml3_layer_reference(params, x, edge_index, edge_attr)
    assert jnp.allclose(out, ref, rtol=5e-2, atol=2e-1), float(jnp.max(jnp.abs(out - ref)))

    print("KERNEL_OK")
</pallas_src>

<mosaic_0001>
module attributes {stable_mosaic.version = 11 : i64} {
  func.func @_ml3_fused_kernel(%arg0: i32, %arg1: memref<48xi32, #tpu.memory_space<smem>>, %arg2: memref<1x48xi32, #tpu.memory_space<vmem>>, %arg3: memref<48x4xf32, #tpu.memory_space<vmem>>, %arg4: memref<16x8xf32, #tpu.memory_space<vmem>>, %arg5: memref<4x24xbf16, #tpu.memory_space<vmem>>, %arg6: memref<8x4xbf16, #tpu.memory_space<vmem>>, %arg7: memref<8x4xbf16, #tpu.memory_space<vmem>>, %arg8: memref<32x16xbf16, #tpu.memory_space<vmem>>, %arg9: memref<1x16xf32, #tpu.memory_space<vmem>>, %arg10: memref<8x4xbf16, #tpu.memory_space<vmem>>, %arg11: memref<1x4xf32, #tpu.memory_space<vmem>>, %arg12: memref<16x18xf32, #tpu.memory_space<vmem>>, %arg13: memref<48x8xf32, #tpu.memory_space<vmem>>) attributes {dimension_semantics = [#tpu.dimension_semantics<arbitrary>], iteration_bounds = array<i64: 1>, scalar_prefetch = 1 : i64, scratch_operands = 1 : i64, tpu.core_type = #tpu.core_type<tc>, window_params = [{pipeline_mode = #tpu.pipeline_mode<synchronous>, transform_indices = @transform_0, window_bounds = array<i64: 1, 48>}, {pipeline_mode = #tpu.pipeline_mode<synchronous>, transform_indices = @transform_1, window_bounds = array<i64: 48, 4>}, {pipeline_mode = #tpu.pipeline_mode<synchronous>, transform_indices = @transform_2, window_bounds = array<i64: 16, 8>}, {pipeline_mode = #tpu.pipeline_mode<synchronous>, transform_indices = @transform_3, window_bounds = array<i64: 4, 24>}, {pipeline_mode = #tpu.pipeline_mode<synchronous>, transform_indices = @transform_4, window_bounds = array<i64: 8, 4>}, {pipeline_mode = #tpu.pipeline_mode<synchronous>, transform_indices = @transform_5, window_bounds = array<i64: 8, 4>}, {pipeline_mode = #tpu.pipeline_mode<synchronous>, transform_indices = @transform_6, window_bounds = array<i64: 32, 16>}, {pipeline_mode = #tpu.pipeline_mode<synchronous>, transform_indices = @transform_7, window_bounds = array<i64: 1, 16>}, {pipeline_mode = #tpu.pipeline_mode<synchronous>, transform_indices = @transform_8, window_bounds = array<i64: 8, 4>}, {pipeline_mode = #tpu.pipeline_mode<synchronous>, transform_indices = @transform_9, window_bounds = array<i64: 1, 4>}, {pipeline_mode = #tpu.pipeline_mode<synchronous>, transform_indices = @transform_10, window_bounds = array<i64: 16, 18>}]} {
    %c0 = arith.constant 0 : index
    %c0_0 = arith.constant 0 : index
    %0 = vector.load %arg4[%c0, %c0_0] : memref<16x8xf32, #tpu.memory_space<vmem>>, vector<16x8xf32>
    %c0_1 = arith.constant 0 : index
    %c0_2 = arith.constant 0 : index
    %1 = vector.load %arg3[%c0_1, %c0_2] : memref<48x4xf32, #tpu.memory_space<vmem>>, vector<48x4xf32>
    %2 = arith.truncf %1 : vector<48x4xf32> to vector<48x4xbf16>
    %c0_3 = arith.constant 0 : index
    %c0_4 = arith.constant 0 : index
    %3 = vector.load %arg5[%c0_3, %c0_4] : memref<4x24xbf16, #tpu.memory_space<vmem>>, vector<4x24xbf16>
    %cst = arith.constant dense<0.000000e+00> : vector<48x24xf32>
    %4 = tpu.matmul %2, %3, %cst {dimension_numbers = #tpu.dot_dimension_numbers<[1], [0], [0], [1], [0, 0, 1, 1], [], []>} : vector<48x4xbf16>, vector<4x24xbf16>, vector<48x24xf32> -> vector<48x24xf32>
    %5 = vector.extract_strided_slice %4 {offsets = [0, 0], sizes = [48, 8], strides = [1, 1]} : vector<48x24xf32> to vector<48x8xf32>
    %cst_5 = arith.constant 0.000000e+00 : f32
    %6 = vector.broadcast %cst_5 : f32 to vector<48x8xf32>
    %7 = arith.maximumf %5, %6 : vector<48x8xf32>
    %8 = vector.extract_strided_slice %4 {offsets = [0, 8], sizes = [48, 8], strides = [1, 1]} : vector<48x24xf32> to vector<48x8xf32>
    %9 = math.tanh %8 : vector<48x8xf32>
    %10 = vector.extract_strided_slice %4 {offsets = [0, 16], sizes = [48, 8], strides = [1, 1]} : vector<48x24xf32> to vector<48x8xf32>
    %11 = math.tanh %10 : vector<48x8xf32>
    %12 = arith.mulf %9, %11 : vector<48x8xf32>
    %13 = arith.truncf %7 : vector<48x8xf32> to vector<48x8xbf16>
    %c0_6 = arith.constant 0 : index
    %c0_7 = arith.constant 0 : index
    %14 = vector.load %arg6[%c0_6, %c0_7] : memref<8x4xbf16, #tpu.memory_space<vmem>>, vector<8x4xbf16>
    %cst_8 = arith.constant dense<0.000000e+00> : vector<48x4xf32>
    %15 = tpu.matmul %13, %14, %cst_8 {dimension_numbers = #tpu.dot_dimension_numbers<[1], [0], [0], [1], [0, 0, 1, 1], [], []>} : vector<48x8xbf16>, vector<8x4xbf16>, vector<48x4xf32> -> vector<48x4xf32>
    %16 = arith.truncf %12 : vector<48x8xf32> to vector<48x8xbf16>
    %c0_9 = arith.constant 0 : index
    %c0_10 = arith.constant 0 : index
    %17 = vector.load %arg7[%c0_9, %c0_10] : memref<8x4xbf16, #tpu.memory_space<vmem>>, vector<8x4xbf16>
    %cst_11 = arith.constant dense<0.000000e+00> : vector<48x4xf32>
    %18 = tpu.matmul %16, %17, %cst_11 {dimension_numbers = #tpu.dot_dimension_numbers<[1], [0], [0], [1], [0, 0, 1, 1], [], []>} : vector<48x8xbf16>, vector<8x4xbf16>, vector<48x4xf32> -> vector<48x4xf32>
    %19 = arith.addf %15, %18 : vector<48x4xf32>
    %cst_12 = arith.constant 0.000000e+00 : f32
    %20 = vector.broadcast %cst_12 : f32 to vector<48x4xf32>
    %21 = arith.maximumf %19, %20 : vector<48x4xf32>
    %c0_13 = arith.constant 0 : index
    %22 = memref.load %arg1[%c0_13] : memref<48xi32, #tpu.memory_space<smem>>
    %23 = arith.index_cast %22 : i32 to index
    %c0_14 = arith.constant 0 : index
    %24 = vector.load %arg4[%23, %c0_14] : memref<16x8xf32, #tpu.memory_space<vmem>>, vector<1x8xf32>
    %c0_15 = arith.constant 0 : index
    %c0_16 = arith.constant 0 : index
    %25 = vector.load %arg13[%c0_15, %c0_16] : memref<48x8xf32, #tpu.memory_space<vmem>>, vector<1x8xf32>
    tpu.vector_store %arg13[%c0_15, %c0_16], %24 {strides = array<i32>} : memref<48x8xf32, #tpu.memory_space<vmem>>, vector<1x8xf32>,
    %c1 = arith.constant 1 : index
    %26 = memref.load %arg1[%c1] : memref<48xi32, #tpu.memory_space<smem>>
    %27 = arith.index_cast %26 : i32 to index
    %c0_17 = arith.constant 0 : index
    %28 = vector.load %arg4[%27, %c0_17] : memref<16x8xf32, #tpu.memory_space<vmem>>, vector<1x8xf32>
    %c1_18 = arith.constant 1 : index
    %c0_19 = arith.constant 0 : index
    %29 = vector.load %arg13[%c1_18, %c0_19] : memref<48x8xf32, #tpu.memory_space<vmem>>, vector<1x8xf32>
    tpu.vector_store %arg13[%c1_18, %c0_19], %28 {strides = array<i32>} : memref<48x8xf32, #tpu.memory_space<vmem>>, vector<1x8xf32>,
    %c2 = arith.constant 2 : index
    %30 = memref.load %arg1[%c2] : memref<48xi32, #tpu.memory_space<smem>>
    %31 = arith.index_cast %30 : i32 to index
    %c0_20 = arith.constant 0 : index
    %32 = vector.load %arg4[%31, %c0_20] : memref<16x8xf32, #tpu.memory_space<vmem>>, vector<1x8xf32>
    %c2_21 = arith.constant 2 : index
    %c0_22 = arith.constant 0 : index
    %33 = vector.load %arg13[%c2_21, %c0_22] : memref<48x8xf32, #tpu.memory_space<vmem>>, vector<1x8xf32>
    tpu.vector_store %arg13[%c2_21, %c0_22], %32 {strides = array<i32>} : memref<48x8xf32, #tpu.memory_space<vmem>>, vector<1x8xf32>,
    %c3 = arith.constant 3 : index
    %34 = memref.load %arg1[%c3] : memref<48xi32, #tpu.memory_space<smem>>
    %35 = arith.index_cast %34 : i32 to index
    %c0_23 = arith.constant 0 : index
    %36 = vector.load %arg4[%35, %c0_23] : memref<16x8xf32, #tpu.memory_space<vmem>>, vector<1x8xf32>
    %c3_24 = arith.constant 3 : index
    %c0_25 = arith.constant 0 : index
    %37 = vector.load %arg13[%c3_24, %c0_25] : memref<48x8xf32, #tpu.memory_space<vmem>>, vector<1x8xf32>
    tpu.vector_store %arg13[%c3_24, %c0_25], %36 {strides = array<i32>} : memref<48x8xf32, #tpu.memory_space<vmem>>, vector<1x8xf32>,
    %c4 = arith.constant 4 : index
    %38 = memref.load %arg1[%c4] : memref<48xi32, #tpu.memory_space<smem>>
    %39 = arith.index_cast %38 : i32 to index
    %c0_26 = arith.constant 0 : index
    %40 = vector.load %arg4[%39, %c0_26] : memref<16x8xf32, #tpu.memory_space<vmem>>, vector<1x8xf32>
    %c4_27 = arith.constant 4 : index
    %c0_28 = arith.constant 0 : index
    %41 = vector.load %arg13[%c4_27, %c0_28] : memref<48x8xf32, #tpu.memory_space<vmem>>, vector<1x8xf32>
    tpu.vector_store %arg13[%c4_27, %c0_28], %40 {strides = array<i32>} : memref<48x8xf32, #tpu.memory_space<vmem>>, vector<1x8xf32>,
    %c5 = arith.constant 5 : index
    %42 = memref.load %arg1[%c5] : memref<48xi32, #tpu.memory_space<smem>>
    %43 = arith.index_cast %42 : i32 to index
    %c0_29 = arith.constant 0 : index
    %44 = vector.load %arg4[%43, %c0_29] : memref<16x8xf32, #tpu.memory_space<vmem>>, vector<1x8xf32>
    %c5_30 = arith.constant 5 : index
    %c0_31 = arith.constant 0 : index
    %45 = vector.load %arg13[%c5_30, %c0_31] : memref<48x8xf32, #tpu.memory_space<vmem>>, vector<1x8xf32>
    tpu.vector_store %arg13[%c5_30, %c0_31], %44 {strides = array<i32>} : memref<48x8xf32, #tpu.memory_space<vmem>>, vector<1x8xf32>,
    %c6 = arith.constant 6 : index
    %46 = memref.load %arg1[%c6] : memref<48xi32, #tpu.memory_space<smem>>
    %47 = arith.index_cast %46 : i32 to index
    %c0_32 = arith.constant 0 : index
    %48 = vector.load %arg4[%47, %c0_32] : memref<16x8xf32, #tpu.memory_space<vmem>>, vector<1x8xf32>
    %c6_33 = arith.constant 6 : index
    %c0_34 = arith.constant 0 : index
    %49 = vector.load %arg13[%c6_33, %c0_34] : memref<48x8xf32, #tpu.memory_space<vmem>>, vector<1x8xf32>
    tpu.vector_store %arg13[%c6_33, %c0_34], %48 {strides = array<i32>} : memref<48x8xf32, #tpu.memory_space<vmem>>, vector<1x8xf32>,
    %c7 = arith.constant 7 : index
    %50 = memref.load %arg1[%c7] : memref<48xi32, #tpu.memory_space<smem>>
    %51 = arith.index_cast %50 : i32 to index
    %c0_35 = arith.constant 0 : index
    %52 = vector.load %arg4[%51, %c0_35] : memref<16x8xf32, #tpu.memory_space<vmem>>, vector<1x8xf32>
    %c7_36 = arith.constant 7 : index
    %c0_37 = arith.constant 0 : index
    %53 = vector.load %arg13[%c7_36, %c0_37] : memref<48x8xf32, #tpu.memory_space<vmem>>, vector<1x8xf32>
    tpu.vector_store %arg13[%c7_36, %c0_37], %52 {strides = array<i32>} : memref<48x8xf32, #tpu.memory_space<vmem>>, vector<1x8xf32>,
    %c8 = arith.constant 8 : index
    %54 = memref.load %arg1[%c8] : memref<48xi32, #tpu.memory_space<smem>>
    %55 = arith.index_cast %54 : i32 to index
    %c0_38 = arith.constant 0 : index
    %56 = vector.load %arg4[%55, %c0_38] : memref<16x8xf32, #tpu.memory_space<vmem>>, vector<1x8xf32>
    %c8_39 = arith.constant 8 : index
    %c0_40 = arith.constant 0 : index
    %57 = vector.load %arg13[%c8_39, %c0_40] : memref<48x8xf32, #tpu.memory_space<vmem>>, vector<1x8xf32>
    tpu.vector_store %arg13[%c8_39, %c0_40], %56 {strides = array<i32>} : memref<48x8xf32, #tpu.memory_space<vmem>>, vector<1x8xf32>,
    %c9 = arith.constant 9 : index
    %58 = memref.load %arg1[%c9] : memref<48xi32, #tpu.memory_space<smem>>
    %59 = arith.index_cast %58 : i32 to index
    %c0_41 = arith.constant 0 : index
    %60 = vector.load %arg4[%59, %c0_41] : memref<16x8xf32, #tpu.memory_space<vmem>>, vector<1x8xf32>
    %c9_42 = arith.constant 9 : index
    %c0_43 = arith.constant 0 : index
    %61 = vector.load %arg13[%c9_42, %c0_43] : memref<48x8xf32, #tpu.memory_space<vmem>>, vector<1x8xf32>
    tpu.vector_store %arg13[%c9_42, %c0_43], %60 {strides = array<i32>} : memref<48x8xf32, #tpu.memory_space<vmem>>, vector<1x8xf32>,
    %c10 = arith.constant 10 : index
    %62 = memref.load %arg1[%c10] : memref<48xi32, #tpu.memory_space<smem>>
    %63 = arith.index_cast %62 : i32 to index
    %c0_44 = arith.constant 0 : index
    %64 = vector.load %arg4[%63, %c0_44] : memref<16x8xf32, #tpu.memory_space<vmem>>, vector<1x8xf32>
    %c10_45 = arith.constant 10 : index
    %c0_46 = arith.constant 0 : index
    %65 = vector.load %arg13[%c10_45, %c0_46] : memref<48x8xf32, #tpu.memory_space<vmem>>, vector<1x8xf32>
    tpu.vector_store %arg13[%c10_45, %c0_46], %64 {strides = array<i32>} : memref<48x8xf32, #tpu.memory_space<vmem>>, vector<1x8xf32>,
    %c11 = arith.constant 11 : index
    %66 = memref.load %arg1[%c11] : memref<48xi32, #tpu.memory_space<smem>>
    %67 = arith.index_cast %66 : i32 to index
    %c0_47 = arith.constant 0 : index
    %68 = vector.load %arg4[%67, %c0_47] : memref<16x8xf32, #tpu.memory_space<vmem>>, vector<1x8xf32>
    %c11_48 = arith.constant 11 : index
    %c0_49 = arith.constant 0 : index
    %69 = vector.load %arg13[%c11_48, %c0_49] : memref<48x8xf32, #tpu.memory_space<vmem>>, vector<1x8xf32>
    tpu.vector_store %arg13[%c11_48, %c0_49], %68 {strides = array<i32>} : memref<48x8xf32, #tpu.memory_space<vmem>>, vector<1x8xf32>,
    %c12 = arith.constant 12 : index
    %70 = memref.load %arg1[%c12] : memref<48xi32, #tpu.memory_space<smem>>
    %71 = arith.index_cast %70 : i32 to index
    %c0_50 = arith.constant 0 : index
    %72 = vector.load %arg4[%71, %c0_50] : memref<16x8xf32, #tpu.memory_space<vmem>>, vector<1x8xf32>
    %c12_51 = arith.constant 12 : index
    %c0_52 = arith.constant 0 : index
    %73 = vector.load %arg13[%c12_51, %c0_52] : memref<48x8xf32, #tpu.memory_space<vmem>>, vector<1x8xf32>
    tpu.vector_store %arg13[%c12_51, %c0_52], %72 {strides = array<i32>} : memref<48x8xf32, #tpu.memory_space<vmem>>, vector<1x8xf32>,
    %c13 = arith.constant 13 : index
    %74 = memref.load %arg1[%c13] : memref<48xi32, #tpu.memory_space<smem>>
    %75 = arith.index_cast %74 : i32 to index
    %c0_53 = arith.constant 0 : index
    %76 = vector.load %arg4[%75, %c0_53] : memref<16x8xf32, #tpu.memory_space<vmem>>, vector<1x8xf32>
    %c13_54 = arith.constant 13 : index
    %c0_55 = arith.constant 0 : index
    %77 = vector.load %arg13[%c13_54, %c0_55] : memref<48x8xf32, #tpu.memory_space<vmem>>, vector<1x8xf32>
    tpu.vector_store %arg13[%c13_54, %c0_55], %76 {strides = array<i32>} : memref<48x8xf32, #tpu.memory_space<vmem>>, vector<1x8xf32>,
    %c14 = arith.constant 14 : index
    %78 = memref.load %arg1[%c14] : memref<48xi32, #tpu.memory_space<smem>>
    %79 = arith.index_cast %78 : i32 to index
    %c0_56 = arith.constant 0 : index
    %80 = vector.load %arg4[%79, %c0_56] : memref<16x8xf32, #tpu.memory_space<vmem>>, vector<1x8xf32>
    %c14_57 = arith.constant 14 : index
    %c0_58 = arith.constant 0 : index
    %81 = vector.load %arg13[%c14_57, %c0_58] : memref<48x8xf32, #tpu.memory_space<vmem>>, vector<1x8xf32>
    tpu.vector_store %arg13[%c14_57, %c0_58], %80 {strides = array<i32>} : memref<48x8xf32, #tpu.memory_space<vmem>>, vector<1x8xf32>,
    %c15 = arith.constant 15 : index
    %82 = memref.load %arg1[%c15] : memref<48xi32, #tpu.memory_space<smem>>
    %83 = arith.index_cast %82 : i32 to index
    %c0_59 = arith.constant 0 : index
    %84 = vector.load %arg4[%83, %c0_59] : memref<16x8xf32, #tpu.memory_space<vmem>>, vector<1x8xf32>
    %c15_60 = arith.constant 15 : index
    %c0_61 = arith.constant 0 : index
    %85 = vector.load %arg13[%c15_60, %c0_61] : memref<48x8xf32, #tpu.memory_space<vmem>>, vector<1x8xf32>
    tpu.vector_store %arg13[%c15_60, %c0_61], %84 {strides = array<i32>} : memref<48x8xf32, #tpu.memory_space<vmem>>, vector<1x8xf32>,
    %c16 = arith.constant 16 : index
    %86 = memref.load %arg1[%c16] : memref<48xi32, #tpu.memory_space<smem>>
    %87 = arith.index_cast %86 : i32 to index
    %c0_62 = arith.constant 0 : index
    %88 = vector.load %arg4[%87, %c0_62] : memref<16x8xf32, #tpu.memory_space<vmem>>, vector<1x8xf32>
    %c16_63 = arith.constant 16 : index
    %c0_64 = arith.constant 0 : index
    %89 = vector.load %arg13[%c16_63, %c0_64] : memref<48x8xf32, #tpu.memory_space<vmem>>, vector<1x8xf32>
    tpu.vector_store %arg13[%c16_63, %c0_64], %88 {strides = array<i32>} : memref<48x8xf32, #tpu.memory_space<vmem>>, vector<1x8xf32>,
    %c17 = arith.constant 17 : index
    %90 = memref.load %arg1[%c17] : memref<48xi32, #tpu.memory_space<smem>>
    %91 = arith.index_cast %90 : i32 to index
    %c0_65 = arith.constant 0 : index
    %92 = vector.load %arg4[%91, %c0_65] : memref<16x8xf32, #tpu.memory_space<vmem>>, vector<1x8xf32>
    %c17_66 = arith.constant 17 : index
    %c0_67 = arith.constant 0 : index
    %93 = vector.load %arg13[%c17_66, %c0_67] : memref<48x8xf32, #tpu.memory_space<vmem>>, vector<1x8xf32>
    tpu.vector_store %arg13[%c17_66, %c0_67], %92 {strides = array<i32>} : memref<48x8xf32, #tpu.memory_space<vmem>>, vector<1x8xf32>,
    %c18 = arith.constant 18 : index
    %94 = memref.load %arg1[%c18] : memref<48xi32, #tpu.memory_space<smem>>
    %95 = arith.index_cast %94 : i32 to index
    %c0_68 = arith.constant 0 : index
    %96 = vector.load %arg4[%95, %c0_68] : memref<16x8xf32, #tpu.memory_space<vmem>>, vector<1x8xf32>
    %c18_69 = arith.constant 18 : index
    %c0_70 = arith.constant 0 : index
    %97 = vector.load %arg13[%c18_69, %c0_70] : memref<48x8xf32, #tpu.memory_space<vmem>>, vector<1x8xf32>
    tpu.vector_store %arg13[%c18_69, %c0_70], %96 {strides = array<i32>} : memref<48x8xf32, #tpu.memory_space<vmem>>, vector<1x8xf32>,
    %c19 = arith.constant 19 : index
    %98 = memref.load %arg1[%c19] : memref<48xi32, #tpu.memory_space<smem>>
    %99 = arith.index_cast %98 : i32 to index
    %c0_71 = arith.constant 0 : index
    %100 = vector.load %arg4[%99, %c0_71] : memref<16x8xf32, #tpu.memory_space<vmem>>, vector<1x8xf32>
    %c19_72 = arith.constant 19 : index
    %c0_73 = arith.constant 0 : index
    %101 = vector.load %arg13[%c19_72, %c0_73] : memref<48x8xf32, #tpu.memory_space<vmem>>, vector<1x8xf32>
    tpu.vector_store %arg13[%c19_72, %c0_73], %100 {strides = array<i32>} : memref<48x8xf32, #tpu.memory_space<vmem>>, vector<1x8xf32>,
    %c20 = arith.constant 20 : index
    %102 = memref.load %arg1[%c20] : memref<48xi32, #tpu.memory_space<smem>>
    %103 = arith.index_cast %102 : i32 to index
    %c0_74 = arith.constant 0 : index
    %104 = vector.load %arg4[%103, %c0_74] : memref<16x8xf32, #tpu.memory_space<vmem>>, vector<1x8xf32>
    %c20_75 = arith.constant 20 : index
    %c0_76 = arith.constant 0 : index
    %105 = vector.load %arg13[%c20_75, %c0_76] : memref<48x8xf32, #tpu.memory_space<vmem>>, vector<1x8xf32>
    tpu.vector_store %arg13[%c20_75, %c0_76], %104 {strides = array<i32>} : memref<48x8xf32, #tpu.memory_space<vmem>>, vector<1x8xf32>,
    %c21 = arith.constant 21 : index
    %106 = memref.load %arg1[%c21] : memref<48xi32, #tpu.memory_space<smem>>
    %107 = arith.index_cast %106 : i32 to index
    %c0_77 = arith.constant 0 : index
    %108 = vector.load %arg4[%107, %c0_77] : memref<16x8xf32, #tpu.memory_space<vmem>>, vector<1x8xf32>
    %c21_78 = arith.constant 21 : index
    %c0_79 = arith.constant 0 : index
    %109 = vector.load %arg13[%c21_78, %c0_79] : memref<48x8xf32, #tpu.memory_space<vmem>>, vector<1x8xf32>
    tpu.vector_store %arg13[%c21_78, %c0_79], %108 {strides = array<i32>} : memref<48x8xf32, #tpu.memory_space<vmem>>, vector<1x8xf32>,
    %c22 = arith.constant 22 : index
    %110 = memref.load %arg1[%c22] : memref<48xi32, #tpu.memory_space<smem>>
    %111 = arith.index_cast %110 : i32 to index
    %c0_80 = arith.constant 0 : index
    %112 = vector.load %arg4[%111, %c0_80] : memref<16x8xf32, #tpu.memory_space<vmem>>, vector<1x8xf32>
    %c22_81 = arith.constant 22 : index
    %c0_82 = arith.constant 0 : index
    %113 = vector.load %arg13[%c22_81, %c0_82] : memref<48x8xf32, #tpu.memory_space<vmem>>, vector<1x8xf32>
    tpu.vector_store %arg13[%c22_81, %c0_82], %112 {strides = array<i32>} : memref<48x8xf32, #tpu.memory_space<vmem>>, vector<1x8xf32>,
    %c23 = arith.constant 23 : index
    %114 = memref.load %arg1[%c23] : memref<48xi32, #tpu.memory_space<smem>>
    %115 = arith.index_cast %114 : i32 to index
    %c0_83 = arith.constant 0 : index
    %116 = vector.load %arg4[%115, %c0_83] : memref<16x8xf32, #tpu.memory_space<vmem>>, vector<1x8xf32>
    %c23_84 = arith.constant 23 : index
    %c0_85 = arith.constant 0 : index
    %117 = vector.load %arg13[%c23_84, %c0_85] : memref<48x8xf32, #tpu.memory_space<vmem>>, vector<1x8xf32>
    tpu.vector_store %arg13[%c23_84, %c0_85], %116 {strides = array<i32>} : memref<48x8xf32, #tpu.memory_space<vmem>>, vector<1x8xf32>,
    %c24 = arith.constant 24 : index
    %118 = memref.load %arg1[%c24] : memref<48xi32, #tpu.memory_space<smem>>
    %119 = arith.index_cast %118 : i32 to index
    %c0_86 = arith.constant 0 : index
    %120 = vector.load %arg4[%119, %c0_86] : memref<16x8xf32, #tpu.memory_space<vmem>>, vector<1x8xf32>
    %c24_87 = arith.constant 24 : index
    %c0_88 = arith.constant 0 : index
    %121 = vector.load %arg13[%c24_87, %c0_88] : memref<48x8xf32, #tpu.memory_space<vmem>>, vector<1x8xf32>
    tpu.vector_store %arg13[%c24_87, %c0_88], %120 {strides = array<i32>} : memref<48x8xf32, #tpu.memory_space<vmem>>, vector<1x8xf32>,
    %c25 = arith.constant 25 : index
    %122 = memref.load %arg1[%c25] : memref<48xi32, #tpu.memory_space<smem>>
    %123 = arith.index_cast %122 : i32 to index
    %c0_89 = arith.constant 0 : index
    %124 = vector.load %arg4[%123, %c0_89] : memref<16x8xf32, #tpu.memory_space<vmem>>, vector<1x8xf32>
    %c25_90 = arith.constant 25 : index
    %c0_91 = arith.constant 0 : index
    %125 = vector.load %arg13[%c25_90, %c0_91] : memref<48x8xf32, #tpu.memory_space<vmem>>, vector<1x8xf32>
    tpu.vector_store %arg13[%c25_90, %c0_91], %124 {strides = array<i32>} : memref<48x8xf32, #tpu.memory_space<vmem>>, vector<1x8xf32>,
    %c26 = arith.constant 26 : index
    %126 = memref.load %arg1[%c26] : memref<48xi32, #tpu.memory_space<smem>>
    %127 = arith.index_cast %126 : i32 to index
    %c0_92 = arith.constant 0 : index
    %128 = vector.load %arg4[%127, %c0_92] : memref<16x8xf32, #tpu.memory_space<vmem>>, vector<1x8xf32>
    %c26_93 = arith.constant 26 : index
    %c0_94 = arith.constant 0 : index
    %129 = vector.load %arg13[%c26_93, %c0_94] : memref<48x8xf32, #tpu.memory_space<vmem>>, vector<1x8xf32>
    tpu.vector_store %arg13[%c26_93, %c0_94], %128 {strides = array<i32>} : memref<48x8xf32, #tpu.memory_space<vmem>>, vector<1x8xf32>,
    %c27 = arith.constant 27 : index
    %130 = memref.load %arg1[%c27] : memref<48xi32, #tpu.memory_space<smem>>
    %131 = arith.index_cast %130 : i32 to index
    %c0_95 = arith.constant 0 : index
    %132 = vector.load %arg4[%131, %c0_95] : memref<16x8xf32, #tpu.memory_space<vmem>>, vector<1x8xf32>
    %c27_96 = arith.constant 27 : index
    %c0_97 = arith.constant 0 : index
    %133 = vector.load %arg13[%c27_96, %c0_97] : memref<48x8xf32, #tpu.memory_space<vmem>>, vector<1x8xf32>
    tpu.vector_store %arg13[%c27_96, %c0_97], %132 {strides = array<i32>} : memref<48x8xf32, #tpu.memory_space<vmem>>, vector<1x8xf32>,
    %c28 = arith.constant 28 : index
    %134 = memref.load %arg1[%c28] : memref<48xi32, #tpu.memory_space<smem>>
    %135 = arith.index_cast %134 : i32 to index
    %c0_98 = arith.constant 0 : index
    %136 = vector.load %arg4[%135, %c0_98] : memref<16x8xf32, #tpu.memory_space<vmem>>, vector<1x8xf32>
    %c28_99 = arith.constant 28 : index
    %c0_100 = arith.constant 0 : index
    %137 = vector.load %arg13[%c28_99, %c0_100] : memref<48x8xf32, #tpu.memory_space<vmem>>, vector<1x8xf32>
    tpu.vector_store %arg13[%c28_99, %c0_100], %136 {strides = array<i32>} : memref<48x8xf32, #tpu.memory_space<vmem>>, vector<1x8xf32>,
    %c29 = arith.constant 29 : index
    %138 = memref.load %arg1[%c29] : memref<48xi32, #tpu.memory_space<smem>>
    %139 = arith.index_cast %138 : i32 to index
    %c0_101 = arith.constant 0 : index
    %140 = vector.load %arg4[%139, %c0_101] : memref<16x8xf32, #tpu.memory_space<vmem>>, vector<1x8xf32>
    %c29_102 = arith.constant 29 : index
    %c0_103 = arith.constant 0 : index
    %141 = vector.load %arg13[%c29_102, %c0_103] : memref<48x8xf32, #tpu.memory_space<vmem>>, vector<1x8xf32>
    tpu.vector_store %arg13[%c29_102, %c0_103], %140 {strides = array<i32>} : memref<48x8xf32, #tpu.memory_space<vmem>>, vector<1x8xf32>,
    %c30 = arith.constant 30 : index
    %142 = memref.load %arg1[%c30] : memref<48xi32, #tpu.memory_space<smem>>
    %143 = arith.index_cast %142 : i32 to index
    %c0_104 = arith.constant 0 : index
    %144 = vector.load %arg4[%143, %c0_104] : memref<16x8xf32, #tpu.memory_space<vmem>>, vector<1x8xf32>
    %c30_105 = arith.constant 30 : index
    %c0_106 = arith.constant 0 : index
    %145 = vector.load %arg13[%c30_105, %c0_106] : memref<48x8xf32, #tpu.memory_space<vmem>>, vector<1x8xf32>
    tpu.vector_store %arg13[%c30_105, %c0_106], %144 {strides = array<i32>} : memref<48x8xf32, #tpu.memory_space<vmem>>, vector<1x8xf32>,
    %c31 = arith.constant 31 : index
    %146 = memref.load %arg1[%c31] : memref<48xi32, #tpu.memory_space<smem>>
    %147 = arith.index_cast %146 : i32 to index
    %c0_107 = arith.constant 0 : index
    %148 = vector.load %arg4[%147, %c0_107] : memref<16x8xf32, #tpu.memory_space<vmem>>, vector<1x8xf32>
    %c31_108 = arith.constant 31 : index
    %c0_109 = arith.constant 0 : index
    %149 = vector.load %arg13[%c31_108, %c0_109] : memref<48x8xf32, #tpu.memory_space<vmem>>, vector<1x8xf32>
    tpu.vector_store %arg13[%c31_108, %c0_109], %148 {strides = array<i32>} : memref<48x8xf32, #tpu.memory_space<vmem>>, vector<1x8xf32>,
    %c32 = arith.constant 32 : index
    %150 = memref.load %arg1[%c32] : memref<48xi32, #tpu.memory_space<smem>>
    %151 = arith.index_cast %150 : i32 to index
    %c0_110 = arith.constant 0 : index
    %152 = vector.load %arg4[%151, %c0_110] : memref<16x8xf32, #tpu.memory_space<vmem>>, vector<1x8xf32>
    %c32_111 = arith.constant 32 : index
    %c0_112 = arith.constant 0 : index
    %153 = vector.load %arg13[%c32_111, %c0_112] : memref<48x8xf32, #tpu.memory_space<vmem>>, vector<1x8xf32>
    tpu.vector_store %arg13[%c32_111, %c0_112], %152 {strides = array<i32>} : memref<48x8xf32, #tpu.memory_space<vmem>>, vector<1x8xf32>,
    %c33 = arith.constant 33 : index
    %154 = memref.load %arg1[%c33] : memref<48xi32, #tpu.memory_space<smem>>
    %155 = arith.index_cast %154 : i32 to index
    %c0_113 = arith.constant 0 : index
    %156 = vector.load %arg4[%155, %c0_113] : memref<16x8xf32, #tpu.memory_space<vmem>>, vector<1x8xf32>
    %c33_114 = arith.constant 33 : index
    %c0_115 = arith.constant 0 : index
    %157 = vector.load %arg13[%c33_114, %c0_115] : memref<48x8xf32, #tpu.memory_space<vmem>>, vector<1x8xf32>
    tpu.vector_store %arg13[%c33_114, %c0_115], %156 {strides = array<i32>} : memref<48x8xf32, #tpu.memory_space<vmem>>, vector<1x8xf32>,
    %c34 = arith.constant 34 : index
    %158 = memref.load %arg1[%c34] : memref<48xi32, #tpu.memory_space<smem>>
    %159 = arith.index_cast %158 : i32 to index
    %c0_116 = arith.constant 0 : index
    %160 = vector.load %arg4[%159, %c0_116] : memref<16x8xf32, #tpu.memory_space<vmem>>, vector<1x8xf32>
    %c34_117 = arith.constant 34 : index
    %c0_118 = arith.constant 0 : index
    %161 = vector.load %arg13[%c34_117, %c0_118] : memref<48x8xf32, #tpu.memory_space<vmem>>, vector<1x8xf32>
    tpu.vector_store %arg13[%c34_117, %c0_118], %160 {strides = array<i32>} : memref<48x8xf32, #tpu.memory_space<vmem>>, vector<1x8xf32>,
    %c35 = arith.constant 35 : index
    %162 = memref.load %arg1[%c35] : memref<48xi32, #tpu.memory_space<smem>>
    %163 = arith.index_cast %162 : i32 to index
    %c0_119 = arith.constant 0 : index
    %164 = vector.load %arg4[%163, %c0_119] : memref<16x8xf32, #tpu.memory_space<vmem>>, vector<1x8xf32>
    %c35_120 = arith.constant 35 : index
    %c0_121 = arith.constant 0 : index
    %165 = vector.load %arg13[%c35_120, %c0_121] : memref<48x8xf32, #tpu.memory_space<vmem>>, vector<1x8xf32>
    tpu.vector_store %arg13[%c35_120, %c0_121], %164 {strides = array<i32>} : memref<48x8xf32, #tpu.memory_space<vmem>>, vector<1x8xf32>,
    %c36 = arith.constant 36 : index
    %166 = memref.load %arg1[%c36] : memref<48xi32, #tpu.memory_space<smem>>
    %167 = arith.index_cast %166 : i32 to index
    %c0_122 = arith.constant 0 : index
    %168 = vector.load %arg4[%167, %c0_122] : memref<16x8xf32, #tpu.memory_space<vmem>>, vector<1x8xf32>
    %c36_123 = arith.constant 36 : index
    %c0_124 = arith.constant 0 : index
    %169 = vector.load %arg13[%c36_123, %c0_124] : memref<48x8xf32, #tpu.memory_space<vmem>>, vector<1x8xf32>
    tpu.vector_store %arg13[%c36_123, %c0_124], %168 {strides = array<i32>} : memref<48x8xf32, #tpu.memory_space<vmem>>, vector<1x8xf32>,
    %c37 = arith.constant 37 : index
    %170 = memref.load %arg1[%c37] : memref<48xi32, #tpu.memory_space<smem>>
    %171 = arith.index_cast %170 : i32 to index
    %c0_125 = arith.constant 0 : index
    %172 = vector.load %arg4[%171, %c0_125] : memref<16x8xf32, #tpu.memory_space<vmem>>, vector<1x8xf32>
    %c37_126 = arith.constant 37 : index
    %c0_127 = arith.constant 0 : index
    %173 = vector.load %arg13[%c37_126, %c0_127] : memref<48x8xf32, #tpu.memory_space<vmem>>, vector<1x8xf32>
    tpu.vector_store %arg13[%c37_126, %c0_127], %172 {strides = array<i32>} : memref<48x8xf32, #tpu.memory_space<vmem>>, vector<1x8xf32>,
    %c38 = arith.constant 38 : index
    %174 = memref.load %arg1[%c38] : memref<48xi32, #tpu.memory_space<smem>>
    %175 = arith.index_cast %174 : i32 to index
    %c0_128 = arith.constant 0 : index
    %176 = vector.load %arg4[%175, %c0_128] : memref<16x8xf32, #tpu.memory_space<vmem>>, vector<1x8xf32>
    %c38_129 = arith.constant 38 : index
    %c0_130 = arith.constant 0 : index
    %177 = vector.load %arg13[%c38_129, %c0_130] : memref<48x8xf32, #tpu.memory_space<vmem>>, vector<1x8xf32>
    tpu.vector_store %arg13[%c38_129, %c0_130], %176 {strides = array<i32>} : memref<48x8xf32, #tpu.memory_space<vmem>>, vector<1x8xf32>,
    %c39 = arith.constant 39 : index
    %178 = memref.load %arg1[%c39] : memref<48xi32, #tpu.memory_space<smem>>
    %179 = arith.index_cast %178 : i32 to index
    %c0_131 = arith.constant 0 : index
    %180 = vector.load %arg4[%179, %c0_131] : memref<16x8xf32, #tpu.memory_space<vmem>>, vector<1x8xf32>
    %c39_132 = arith.constant 39 : index
    %c0_133 = arith.constant 0 : index
    %181 = vector.load %arg13[%c39_132, %c0_133] : memref<48x8xf32, #tpu.memory_space<vmem>>, vector<1x8xf32>
    tpu.vector_store %arg13[%c39_132, %c0_133], %180 {strides = array<i32>} : memref<48x8xf32, #tpu.memory_space<vmem>>, vector<1x8xf32>,
    %c40 = arith.constant 40 : index
    %182 = memref.load %arg1[%c40] : memref<48xi32, #tpu.memory_space<smem>>
    %183 = arith.index_cast %182 : i32 to index
    %c0_134 = arith.constant 0 : index
    %184 = vector.load %arg4[%183, %c0_134] : memref<16x8xf32, #tpu.memory_space<vmem>>, vector<1x8xf32>
    %c40_135 = arith.constant 40 : index
    %c0_136 = arith.constant 0 : index
    %185 = vector.load %arg13[%c40_135, %c0_136] : memref<48x8xf32, #tpu.memory_space<vmem>>, vector<1x8xf32>
    tpu.vector_store %arg13[%c40_135, %c0_136], %184 {strides = array<i32>} : memref<48x8xf32, #tpu.memory_space<vmem>>, vector<1x8xf32>,
    %c41 = arith.constant 41 : index
    %186 = memref.load %arg1[%c41] : memref<48xi32, #tpu.memory_space<smem>>
    %187 = arith.index_cast %186 : i32 to index
    %c0_137 = arith.constant 0 : index
    %188 = vector.load %arg4[%187, %c0_137] : memref<16x8xf32, #tpu.memory_space<vmem>>, vector<1x8xf32>
    %c41_138 = arith.constant 41 : index
    %c0_139 = arith.constant 0 : index
    %189 = vector.load %arg13[%c41_138, %c0_139] : memref<48x8xf32, #tpu.memory_space<vmem>>, vector<1x8xf32>
    tpu.vector_store %arg13[%c41_138, %c0_139], %188 {strides = array<i32>} : memref<48x8xf32, #tpu.memory_space<vmem>>, vector<1x8xf32>,
    %c42 = arith.constant 42 : index
    %190 = memref.load %arg1[%c42] : memref<48xi32, #tpu.memory_space<smem>>
    %191 = arith.index_cast %190 : i32 to index
    %c0_140 = arith.constant 0 : index
    %192 = vector.load %arg4[%191, %c0_140] : memref<16x8xf32, #tpu.memory_space<vmem>>, vector<1x8xf32>
    %c42_141 = arith.constant 42 : index
    %c0_142 = arith.constant 0 : index
    %193 = vector.load %arg13[%c42_141, %c0_142] : memref<48x8xf32, #tpu.memory_space<vmem>>, vector<1x8xf32>
    tpu.vector_store %arg13[%c42_141, %c0_142], %192 {strides = array<i32>} : memref<48x8xf32, #tpu.memory_space<vmem>>, vector<1x8xf32>,
    %c43 = arith.constant 43 : index
    %194 = memref.load %arg1[%c43] : memref<48xi32, #tpu.memory_space<smem>>
    %195 = arith.index_cast %194 : i32 to index
    %c0_143 = arith.constant 0 : index
    %196 = vector.load %arg4[%195, %c0_143] : memref<16x8xf32, #tpu.memory_space<vmem>>, vector<1x8xf32>
    %c43_144 = arith.constant 43 : index
    %c0_145 = arith.constant 0 : index
    %197 = vector.load %arg13[%c43_144, %c0_145] : memref<48x8xf32, #tpu.memory_space<vmem>>, vector<1x8xf32>
    tpu.vector_store %arg13[%c43_144, %c0_145], %196 {strides = array<i32>} : memref<48x8xf32, #tpu.memory_space<vmem>>, vector<1x8xf32>,
    %c44 = arith.constant 44 : index
    %198 = memref.load %arg1[%c44] : memref<48xi32, #tpu.memory_space<smem>>
    %199 = arith.index_cast %198 : i32 to index
    %c0_146 = arith.constant 0 : index
    %200 = vector.load %arg4[%199, %c0_146] : memref<16x8xf32, #tpu.memory_space<vmem>>, vector<1x8xf32>
    %c44_147 = arith.constant 44 : index
    %c0_148 = arith.constant 0 : index
    %201 = vector.load %arg13[%c44_147, %c0_148] : memref<48x8xf32, #tpu.memory_space<vmem>>, vector<1x8xf32>
    tpu.vector_store %arg13[%c44_147, %c0_148], %200 {strides = array<i32>} : memref<48x8xf32, #tpu.memory_space<vmem>>, vector<1x8xf32>,
    %c45 = arith.constant 45 : index
    %202 = memref.load %arg1[%c45] : memref<48xi32, #tpu.memory_space<smem>>
    %203 = arith.index_cast %202 : i32 to index
    %c0_149 = arith.constant 0 : index
    %204 = vector.load %arg4[%203, %c0_149] : memref<16x8xf32, #tpu.memory_space<vmem>>, vector<1x8xf32>
    %c45_150 = arith.constant 45 : index
    %c0_151 = arith.constant 0 : index
    %205 = vector.load %arg13[%c45_150, %c0_151] : memref<48x8xf32, #tpu.memory_space<vmem>>, vector<1x8xf32>
    tpu.vector_store %arg13[%c45_150, %c0_151], %204 {strides = array<i32>} : memref<48x8xf32, #tpu.memory_space<vmem>>, vector<1x8xf32>,
    %c46 = arith.constant 46 : index
    %206 = memref.load %arg1[%c46] : memref<48xi32, #tpu.memory_space<smem>>
    %207 = arith.index_cast %206 : i32 to index
    %c0_152 = arith.constant 0 : index
    %208 = vector.load %arg4[%207, %c0_152] : memref<16x8xf32, #tpu.memory_space<vmem>>, vector<1x8xf32>
    %c46_153 = arith.constant 46 : index
    %c0_154 = arith.constant 0 : index
    %209 = vector.load %arg13[%c46_153, %c0_154] : memref<48x8xf32, #tpu.memory_space<vmem>>, vector<1x8xf32>
    tpu.vector_store %arg13[%c46_153, %c0_154], %208 {strides = array<i32>} : memref<48x8xf32, #tpu.memory_space<vmem>>, vector<1x8xf32>,
    %c47 = arith.constant 47 : index
    %210 = memref.load %arg1[%c47] : memref<48xi32, #tpu.memory_space<smem>>
    %211 = arith.index_cast %210 : i32 to index
    %c0_155 = arith.constant 0 : index
    %212 = vector.load %arg4[%211, %c0_155] : memref<16x8xf32, #tpu.memory_space<vmem>>, vector<1x8xf32>
    %c47_156 = arith.constant 47 : index
    %c0_157 = arith.constant 0 : index
    %213 = vector.load %arg13[%c47_156, %c0_157] : memref<48x8xf32, #tpu.memory_space<vmem>>, vector<1x8xf32>
    tpu.vector_store %arg13[%c47_156, %c0_157], %212 {strides = array<i32>} : memref<48x8xf32, #tpu.memory_space<vmem>>, vector<1x8xf32>,
    %c0_158 = arith.constant 0 : index
    %c0_159 = arith.constant 0 : index
    %214 = vector.load %arg13[%c0_158, %c0_159] : memref<48x8xf32, #tpu.memory_space<vmem>>, vector<48x8xf32>
    %215 = vector.extract_strided_slice %21 {offsets = [0, 0], sizes = [48, 1], strides = [1, 1]} : vector<48x4xf32> to vector<48x1xf32>
    %216 = vector.broadcast %215 : vector<48x1xf32> to vector<48x8xf32>
    %217 = arith.mulf %216, %214 : vector<48x8xf32>
    %218 = vector.extract_strided_slice %21 {offsets = [0, 1], sizes = [48, 1], strides = [1, 1]} : vector<48x4xf32> to vector<48x1xf32>
    %219 = vector.broadcast %218 : vector<48x1xf32> to vector<48x8xf32>
    %220 = arith.mulf %219, %214 : vector<48x8xf32>
    %221 = vector.extract_strided_slice %21 {offsets = [0, 2], sizes = [48, 1], strides = [1, 1]} : vector<48x4xf32> to vector<48x1xf32>
    %222 = vector.broadcast %221 : vector<48x1xf32> to vector<48x8xf32>
    %223 = arith.mulf %222, %214 : vector<48x8xf32>
    %224 = vector.extract_strided_slice %21 {offsets = [0, 3], sizes = [48, 1], strides = [1, 1]} : vector<48x4xf32> to vector<48x1xf32>
    %225 = vector.broadcast %224 : vector<48x1xf32> to vector<48x8xf32>
    %226 = arith.mulf %225, %214 : vector<48x8xf32>
    %227 = tpu.concatenate %217, %220, %223, %226 in 1 : vector<48x8xf32>, vector<48x8xf32>, vector<48x8xf32>, vector<48x8xf32> -> vector<48x32xf32>
    %228 = arith.truncf %227 : vector<48x32xf32> to vector<48x32xbf16>
    %c0_160 = arith.constant 0 : index
    %c0_161 = arith.constant 0 : index
    %229 = vector.load %arg8[%c0_160, %c0_161] : memref<32x16xbf16, #tpu.memory_space<vmem>>, vector<32x16xbf16>
    %cst_162 = arith.constant dense<0.000000e+00> : vector<48x16xf32>
    %230 = tpu.matmul %228, %229, %cst_162 {dimension_numbers = #tpu.dot_dimension_numbers<[1], [0], [0], [1], [0, 0, 1, 1], [], []>} : vector<48x32xbf16>, vector<32x16xbf16>, vector<48x16xf32> -> vector<48x16xf32>
    %c0_163 = arith.constant 0 : index
    %c0_164 = arith.constant 0 : index
    %231 = vector.load %arg2[%c0_163, %c0_164] : memref<1x48xi32, #tpu.memory_space<vmem>>, vector<1x48xi32>
    %232 = tpu.iota {dimensions = array<i32: 0>} : vector<16x48xi32>
    %233 = vector.broadcast %231 : vector<1x48xi32> to vector<16x48xi32>
    %234 = arith.cmpi eq, %232, %233 : vector<16x48xi32>
    %235 = arith.extui %234 : vector<16x48xi1> to vector<16x48xi32>
    %236 = arith.sitofp %235 : vector<16x48xi32> to vector<16x48xf32>
    %237 = arith.truncf %236 : vector<16x48xf32> to vector<16x48xbf16>
    %238 = arith.truncf %230 : vector<48x16xf32> to vector<48x16xbf16>
    %cst_165 = arith.constant dense<0.000000e+00> : vector<16x16xf32>
    %239 = tpu.matmul %237, %238, %cst_165 {dimension_numbers = #tpu.dot_dimension_numbers<[1], [0], [0], [1], [0, 0, 1, 1], [], []>} : vector<16x48xbf16>, vector<48x16xbf16>, vector<16x16xf32> -> vector<16x16xf32>
    %c0_166 = arith.constant 0 : index
    %c0_167 = arith.constant 0 : index
    %240 = vector.load %arg9[%c0_166, %c0_167] : memref<1x16xf32, #tpu.memory_space<vmem>>, vector<1x16xf32>
    %241 = vector.broadcast %240 : vector<1x16xf32> to vector<16x16xf32>
    %242 = arith.addf %239, %241 : vector<16x16xf32>
    %cst_168 = arith.constant 0.000000e+00 : f32
    %243 = vector.broadcast %cst_168 : f32 to vector<16x16xf32>
    %244 = arith.maximumf %242, %243 : vector<16x16xf32>
    %245 = arith.truncf %0 : vector<16x8xf32> to vector<16x8xbf16>
    %c0_169 = arith.constant 0 : index
    %c0_170 = arith.constant 0 : index
    %246 = vector.load %arg10[%c0_169, %c0_170] : memref<8x4xbf16, #tpu.memory_space<vmem>>, vector<8x4xbf16>
    %cst_171 = arith.constant dense<0.000000e+00> : vector<16x4xf32>
    %247 = tpu.matmul %245, %246, %cst_171 {dimension_numbers = #tpu.dot_dimension_numbers<[1], [0], [0], [1], [0, 0, 1, 1], [], []>} : vector<16x8xbf16>, vector<8x4xbf16>, vector<16x4xf32> -> vector<16x4xf32>
    %c0_172 = arith.constant 0 : index
    %c0_173 = arith.constant 0 : index
    %248 = vector.load %arg11[%c0_172, %c0_173] : memref<1x4xf32, #tpu.memory_space<vmem>>, vector<1x4xf32>
    %249 = vector.broadcast %248 : vector<1x4xf32> to vector<16x4xf32>
    %250 = arith.addf %247, %249 : vector<16x4xf32>
    %251 = vector.extract_strided_slice %250 {offsets = [0, 0], sizes = [16, 2], strides = [1, 1]} : vector<16x4xf32> to vector<16x2xf32>
    %252 = math.tanh %251 : vector<16x2xf32>
    %253 = vector.extract_strided_slice %250 {offsets = [0, 2], sizes = [16, 2], strides = [1, 1]} : vector<16x4xf32> to vector<16x2xf32>
    %254 = math.tanh %253 : vector<16x2xf32>
    %255 = arith.mulf %252, %254 : vector<16x2xf32>
    %256 = tpu.concatenate %244, %255 in 1 : vector<16x16xf32>, vector<16x2xf32> -> vector<16x18xf32>
    %c0_174 = arith.constant 0 : index
    %c0_175 = arith.constant 0 : index
    %257 = vector.load %arg12[%c0_174, %c0_175] : memref<16x18xf32, #tpu.memory_space<vmem>>, vector<16x18xf32>
    tpu.vector_store %arg12[%c0_174, %c0_175], %256 {strides = array<i32>} : memref<16x18xf32, #tpu.memory_space<vmem>>, vector<16x18xf32>,
    return
  }
  func.func @transform_0(%arg0: i32, %arg1: memref<48xi32, #tpu.memory_space<smem>>) -> (i32, i32) {
    %c0_i32 = arith.constant 0 : i32
    %c0_i32_0 = arith.constant 0 : i32
    %c0_i32_1 = arith.constant 0 : i32
    return %c0_i32, %c0_i32_0 : i32, i32
  }
  func.func @transform_1(%arg0: i32, %arg1: memref<48xi32, #tpu.memory_space<smem>>) -> (i32, i32) {
    %c0_i32 = arith.constant 0 : i32
    %c0_i32_0 = arith.constant 0 : i32
    %c0_i32_1 = arith.constant 0 : i32
    return %c0_i32, %c0_i32_0 : i32, i32
  }
  func.func @transform_2(%arg0: i32, %arg1: memref<48xi32, #tpu.memory_space<smem>>) -> (i32, i32) {
    %c0_i32 = arith.constant 0 : i32
    %c0_i32_0 = arith.constant 0 : i32
    %c0_i32_1 = arith.constant 0 : i32
    return %c0_i32, %c0_i32_0 : i32, i32
  }
  func.func @transform_3(%arg0: i32, %arg1: memref<48xi32, #tpu.memory_space<smem>>) -> (i32, i32) {
    %c0_i32 = arith.constant 0 : i32
    %c0_i32_0 = arith.constant 0 : i32
    %c0_i32_1 = arith.constant 0 : i32
    return %c0_i32, %c0_i32_0 : i32, i32
  }
  func.func @transform_4(%arg0: i32, %arg1: memref<48xi32, #tpu.memory_space<smem>>) -> (i32, i32) {
    %c0_i32 = arith.constant 0 : i32
    %c0_i32_0 = arith.constant 0 : i32
    %c0_i32_1 = arith.constant 0 : i32
    return %c0_i32, %c0_i32_0 : i32, i32
  }
  func.func @transform_5(%arg0: i32, %arg1: memref<48xi32, #tpu.memory_space<smem>>) -> (i32, i32) {
    %c0_i32 = arith.constant 0 : i32
    %c0_i32_0 = arith.constant 0 : i32
    %c0_i32_1 = arith.constant 0 : i32
    return %c0_i32, %c0_i32_0 : i32, i32
  }
  func.func @transform_6(%arg0: i32, %arg1: memref<48xi32, #tpu.memory_space<smem>>) -> (i32, i32) {
    %c0_i32 = arith.constant 0 : i32
    %c0_i32_0 = arith.constant 0 : i32
    %c0_i32_1 = arith.constant 0 : i32
    return %c0_i32, %c0_i32_0 : i32, i32
  }
  func.func @transform_7(%arg0: i32, %arg1: memref<48xi32, #tpu.memory_space<smem>>) -> (i32, i32) {
    %c0_i32 = arith.constant 0 : i32
    %c0_i32_0 = arith.constant 0 : i32
    %c0_i32_1 = arith.constant 0 : i32
    return %c0_i32, %c0_i32_0 : i32, i32
  }
  func.func @transform_8(%arg0: i32, %arg1: memref<48xi32, #tpu.memory_space<smem>>) -> (i32, i32) {
    %c0_i32 = arith.constant 0 : i32
    %c0_i32_0 = arith.constant 0 : i32
    %c0_i32_1 = arith.constant 0 : i32
    return %c0_i32, %c0_i32_0 : i32, i32
  }
  func.func @transform_9(%arg0: i32, %arg1: memref<48xi32, #tpu.memory_space<smem>>) -> (i32, i32) {
    %c0_i32 = arith.constant 0 : i32
    %c0_i32_0 = arith.constant 0 : i32
    %c0_i32_1 = arith.constant 0 : i32
    return %c0_i32, %c0_i32_0 : i32, i32
  }
  func.func @transform_10(%arg0: i32, %arg1: memref<48xi32, #tpu.memory_space<smem>>) -> (i32, i32) {
    %c0_i32 = arith.constant 0 : i32
    %c0_i32_0 = arith.constant 0 : i32
    %c0_i32_1 = arith.constant 0 : i32
    return %c0_i32, %c0_i32_0 : i32, i32
  }
}

</mosaic_0001>

<llo_original>
// kernel: tpu_custom_call.1
$region0: #{tpu_custom_call.1}
  #allocation0 [shape = 'u32[]', space=smem, size = 0x4, offset = 0x4, fixed_abs, tag = 'smem constant byte address 0x4 - core index']
  #allocation1 [shape = 'u32[72,128]{1,0:T(1,128)}', space=vmem, size = 0x9000, scoped, tag = 'internal scratch']
  #allocation2 [shape = 'f32[48,8]{1,0:T(8,128)}', space=vmem, size = 0x6000, scoped, tag = 'scratch operand']
  #allocation3 [shape = 's32[1]{0}', space=sflag, size = 0x4, scoped, tag = 'scoped memory for tpu_custom_call.1']
  #allocation4 [shape = 'u8[512]{0}', space=smem, size = 0x200, scoped, tag = 'prefetched SMEM operand 0']
  %s0 = inlined_call_operand.vmem [shape: s32[48], index: 0, kind: input, shape index: {}]
  %s1 = inlined_call_operand.vmem [shape: s32[1,48], index: 1, kind: input, shape index: {}]
  %s2 = inlined_call_operand.vmem [shape: f32[48,4], index: 2, kind: input, shape index: {}]
  %s3 = inlined_call_operand.vmem [shape: f32[16,8], index: 3, kind: input, shape index: {}]
  %s4 = inlined_call_operand.vmem [shape: bf16[4,24], index: 4, kind: input, shape index: {}]
  %s5 = inlined_call_operand.vmem [shape: bf16[8,4], index: 5, kind: input, shape index: {}]
  %s6 = inlined_call_operand.vmem [shape: bf16[8,4], index: 6, kind: input, shape index: {}]
  %s7 = inlined_call_operand.vmem [shape: bf16[32,16], index: 7, kind: input, shape index: {}]
  %s8 = inlined_call_operand.vmem [shape: f32[1,16], index: 8, kind: input, shape index: {}]
  %s9 = inlined_call_operand.vmem [shape: bf16[8,4], index: 9, kind: input, shape index: {}]
  %s10 = inlined_call_operand.vmem [shape: f32[1,4], index: 10, kind: input, shape index: {}]
  %s11 = inlined_call_operand.hbm [shape: f32[16,18], index: 11, kind: output, shape index: {}]
  %s12 = sld [smem:[#allocation0]]
  $region50: #{tpu_custom_call.1} parent=0
    _
  %s14 = ssub.s32 1, %s12
  %s15 = scalar_select 0, %s14, %s12
  %s17 = sshll.u32 %s0, 4
  %s18 = int_to_ptr.vmem [resolvable:$true] %s17
  %20 = dma.vmem_to_smem %s18, 16, [#allocation4], [#allocation3]
  %22 = dma.done [#allocation3], 16
  %23 = sfence
  $region1: #{tpu_custom_call.1} parent=0
    #allocation5 [shape = 'u8[8192]{0}', space=vmem, size = 0x2000, scoped, tag = 'output window, operand 0, single buffered']
    #allocation6 [shape = 's32[1]{0}', space=sflag, size = 0x4, scoped, tag = 'scoped memory for tpu_custom_call.1']
    %24 = vsyncpa [#allocation6], 0
    // Predicated region
    $region2: #{tpu_custom_call.1} parent=1 // pred_check
      _
    $region3: #{tpu_custom_call.1} parent=1 // pred_check_branch
      %26 = sbr.rel (0) target = $region5
    $region4: #{tpu_custom_call.1} parent=1 // pred_region
      _
    $region5: #{tpu_custom_call.1} parent=1 // pred_fallthru
      _
    // Predicated region
    $region6: #{tpu_custom_call.1} parent=1 // pred_check
      _
    $region7: #{tpu_custom_call.1} parent=1 // pred_check_branch
      %28 = sbr.rel (0) target = $region9
    $region8: #{tpu_custom_call.1} parent=1 // pred_region
      _
    $region9: #{tpu_custom_call.1} parent=1 // pred_fallthru
      _
    // Predicated region
    $region10: #{tpu_custom_call.1} parent=1 // pred_check
      _
    $region11: #{tpu_custom_call.1} parent=1 // pred_check_branch
      %30 = sbr.rel (0) target = $region13
    $region12: #{tpu_custom_call.1} parent=1 // pred_region
      _
    $region13: #{tpu_custom_call.1} parent=1 // pred_fallthru
      _
    // Predicated region
    $region14: #{tpu_custom_call.1} parent=1 // pred_check
      _
    $region15: #{tpu_custom_call.1} parent=1 // pred_check_branch
      %32 = sbr.rel (0) target = $region17
    $region16: #{tpu_custom_call.1} parent=1 // pred_region
      _
    $region17: #{tpu_custom_call.1} parent=1 // pred_fallthru
      _
    // Predicated region
    $region18: #{tpu_custom_call.1} parent=1 // pred_check
      _
    $region19: #{tpu_custom_call.1} parent=1 // pred_check_branch
      %34 = sbr.rel (0) target = $region21
    $region20: #{tpu_custom_call.1} parent=1 // pred_region
      _
    $region21: #{tpu_custom_call.1} parent=1 // pred_fallthru
      _
    // Predicated region
    $region22: #{tpu_custom_call.1} parent=1 // pred_check
      _
    $region23: #{tpu_custom_call.1} parent=1 // pred_check_branch
      %36 = sbr.rel (0) target = $region25
    $region24: #{tpu_custom_call.1} parent=1 // pred_region
      _
    $region25: #{tpu_custom_call.1} parent=1 // pred_fallthru
      _
    // Predicated region
    $region26: #{tpu_custom_call.1} parent=1 // pred_check
      _
    $region27: #{tpu_custom_call.1} parent=1 // pred_check_branch
      %38 = sbr.rel (0) target = $region29
    $region28: #{tpu_custom_call.1} parent=1 // pred_region
      _
    $region29: #{tpu_custom_call.1} parent=1 // pred_fallthru
      _
    // Predicated region
    $region30: #{tpu_custom_call.1} parent=1 // pred_check
      _
    $region31: #{tpu_custom_call.1} parent=1 // pred_check_branch
      %40 = sbr.rel (0) target = $region33
    $region32: #{tpu_custom_call.1} parent=1 // pred_region
      _
    $region33: #{tpu_custom_call.1} parent=1 // pred_fallthru
      _
    // Predicated region
    $region34: #{tpu_custom_call.1} parent=1 // pred_check
      _
    $region35: #{tpu_custom_call.1} parent=1 // pred_check_branch
      %42 = sbr.rel (0) target = $region37
    $region36: #{tpu_custom_call.1} parent=1 // pred_region
      _
    $region37: #{tpu_custom_call.1} parent=1 // pred_fallthru
      _
    // Predicated region
    $region38: #{tpu_custom_call.1} parent=1 // pred_check
      _
    $region39: #{tpu_custom_call.1} parent=1 // pred_check_branch
      %44 = sbr.rel (0) target = $region41
    $region40: #{tpu_custom_call.1} parent=1 // pred_region
      _
    $region41: #{tpu_custom_call.1} parent=1 // pred_fallthru
      _
    %v46 = vld [vmem:[%s3] sm:$0xff]
    %v47 = vld [vmem:[%s3 + $0x8] sm:$0xff]
    %v48 = vld [vmem:[%s2] sm:$0xff]
    %v49 = vld [vmem:[%s2 + $0x8] sm:$0xff]
    %v50 = vld [vmem:[%s2 + $0x10] sm:$0xff]
    %v51 = vld [vmem:[%s2 + $0x18] sm:$0xff]
    %v52 = vld [vmem:[%s2 + $0x20] sm:$0xff]
    %v53 = vld [vmem:[%s2 + $0x28] sm:$0xff]
    %v54 = vpack.c.bf16 %v49, %v48
    %v55 = vpack.c.bf16 %v51, %v50
    %v56 = vpack.c.bf16 %v53, %v52
    %v57 = vld [vmem:[%s4] sm:$0x3]
    %vm58 = vcmask 31744
    %v60 = vsel %vm58, %v54, 0
    %v63 = vsel %vm58, %v55, 0
    %v66 = vsel %vm58, %v56, 0
    %vm68 = vcmask 1041408
    %v70 = vsel %vm68, %v57, 0
    %72 = vmatpush.bf16.msra.mxu0 0
    %73 = vmatpush.bf16.msra.mxu0 0
    %74 = vmatpush.bf16.msra.mxu0 0
    %75 = vmatpush.bf16.msra.mxu0 0
    %76 = vmatpush.bf16.msra.mxu0 0
    %77 = vmatpush.bf16.msra.mxu0 0
    %78 = vmatpush.bf16.msra.mxu0 0
    %79 = vmatpush.bf16.msra.mxu0 %v70
    %80 = vmatmul.bf16.gmra.mxu0 %v60
    %v81 = vpop.f32.mrf.mxu0
    %v82 = vadd.f32 0.0, %v81
    %v83 = vpop.f32.mrf.mxu0
    %v84 = vadd.f32 0.0, %v83
    %85 = vmatmul.bf16.gmra.mxu0 %v63
    %v86 = vpop.f32.mrf.mxu0
    %v87 = vadd.f32 0.0, %v86
    %v88 = vpop.f32.mrf.mxu0
    %v89 = vadd.f32 0.0, %v88
    %90 = vmatmul.bf16.gmra.mxu0 %v66
    %v91 = vpop.f32.mrf.mxu0
    %v92 = vadd.f32 0.0, %v91
    %v93 = vpop.f32.mrf.mxu0
    %v94 = vadd.f32 0.0, %v93
    %95 = vdwg.mxu0
    %v96 = vmax.f32 %v82, 0.0
    %v97 = vmax.f32 %v84, 0.0
    %v98 = vmax.f32 %v87, 0.0
    %v99 = vmax.f32 %v89, 0.0
    %v100 = vmax.f32 %v92, 0.0
    %v101 = vmax.f32 %v94, 0.0
    %v102 = vtanh.pop %v82
    %v103 = vtanh.pop %v84
    %v104 = vtanh.pop %v87
    %v105 = vtanh.pop %v89
    %v106 = vtanh.pop %v92
    %v107 = vtanh.pop %v94
    %114 = vrot.lane.b32.xlu0 %v102, 120
    %v115 = vpop.permute.xlu0 %114
    %116 = vrot.lane.b32.xlu0 %v103, 120
    %v117 = vpop.permute.xlu0 %116
    %118 = vrot.lane.b32.xlu0 %v104, 120
    %v119 = vpop.permute.xlu0 %118
    %120 = vrot.lane.b32.xlu0 %v105, 120
    %v121 = vpop.permute.xlu0 %120
    %122 = vrot.lane.b32.xlu0 %v106, 120
    %v123 = vpop.permute.xlu0 %122
    %124 = vrot.lane.b32.xlu0 %v107, 120
    %v125 = vpop.permute.xlu0 %124
    %v132 = vmul.f32 %v102, %v115
    %v133 = vmul.f32 %v103, %v117
    %v134 = vmul.f32 %v104, %v119
    %v135 = vmul.f32 %v105, %v121
    %v136 = vmul.f32 %v106, %v123
    %v137 = vmul.f32 %v107, %v125
    %v138 = vpack.c.bf16 %v97, %v96
    %v139 = vpack.c.bf16 %v99, %v98
    %v140 = vpack.c.bf16 %v101, %v100
    %v141 = vld [vmem:[%s5] sm:$0xf]
    %v142 = vpack.c.bf16 %v133, %v132
    %v143 = vpack.c.bf16 %v135, %v134
    %v144 = vpack.c.bf16 %v137, %v136
    %v145 = vld [vmem:[%s6] sm:$0xf]
    %149 = vrot.lane.b32.xlu0 %v142, 120
    %v150 = vpop.permute.xlu0 %149
    %151 = vrot.lane.b32.xlu0 %v143, 120
    %v152 = vpop.permute.xlu0 %151
    %153 = vrot.lane.b32.xlu0 %v144, 120
    %v154 = vpop.permute.xlu0 %153
    %vm155 = vcmask 64512
    %v157 = vsel %vm155, %v150, 0
    %v160 = vsel %vm155, %v152, 0
    %v163 = vsel %vm155, %v154, 0
    %vm165 = vcmask 1043456
    %v167 = vsel %vm165, %v145, 0
    %169 = vmatpush.bf16.msra.mxu0 0
    %170 = vmatpush.bf16.msra.mxu0 0
    %171 = vmatpush.bf16.msra.mxu0 0
    %172 = vmatpush.bf16.msra.mxu0 0
    %173 = vmatpush.bf16.msra.mxu0 0
    %174 = vmatpush.bf16.msra.mxu0 0
    %175 = vmatpush.bf16.msra.mxu0 0
    %176 = vmatpush.bf16.msra.mxu0 %v167
    %177 = vmatmul.bf16.gmra.mxu0 %v157
    %v178 = vpop.f32.mrf.mxu0
    %v179 = vadd.f32 0.0, %v178
    %v180 = vpop.f32.mrf.mxu0
    %v181 = vadd.f32 0.0, %v180
    %182 = vmatmul.bf16.gmra.mxu0 %v160
    %v183 = vpop.f32.mrf.mxu0
    %v184 = vadd.f32 0.0, %v183
    %v185 = vpop.f32.mrf.mxu0
    %v186 = vadd.f32 0.0, %v185
    %187 = vmatmul.bf16.gmra.mxu0 %v163
    %v188 = vpop.f32.mrf.mxu0
    %v189 = vadd.f32 0.0, %v188
    %v190 = vpop.f32.mrf.mxu0
    %v191 = vadd.f32 0.0, %v190
    %192 = vdwg.mxu0
    %v194 = vsel %vm155, %v138, 0
    %v197 = vsel %vm155, %v139, 0
    %v200 = vsel %vm155, %v140, 0
    %v203 = vsel %vm165, %v141, 0
    %205 = vmatpush.bf16.msra.mxu0 0
    %206 = vmatpush.bf16.msra.mxu0 0
    %207 = vmatpush.bf16.msra.mxu0 0
    %208 = vmatpush.bf16.msra.mxu0 0
    %209 = vmatpush.bf16.msra.mxu0 0
    %210 = vmatpush.bf16.msra.mxu0 0
    %211 = vmatpush.bf16.msra.mxu0 0
    %212 = vmatpush.bf16.msra.mxu0 %v203
    %213 = vmatmul.bf16.gmra.mxu0 %v194
    %v214 = vpop.f32.mrf.mxu0
    %v215 = vadd.f32 %v179, %v214
    %v216 = vpop.f32.mrf.mxu0
    %v217 = vadd.f32 %v181, %v216
    %218 = vmatmul.bf16.gmra.mxu0 %v197
    %v219 = vpop.f32.mrf.mxu0
    %v220 = vadd.f32 %v184, %v219
    %v221 = vpop.f32.mrf.mxu0
    %v222 = vadd.f32 %v186, %v221
    %223 = vmatmul.bf16.gmra.mxu0 %v200
    %v224 = vpop.f32.mrf.mxu0
    %v225 = vadd.f32 %v189, %v224
    %v226 = vpop.f32.mrf.mxu0
    %v227 = vadd.f32 %v191, %v226
    %228 = vdwg.mxu0
    %v229 = vmax.f32 %v215, 0.0
    %v230 = vmax.f32 %v217, 0.0
    %v231 = vmax.f32 %v220, 0.0
    %v232 = vmax.f32 %v222, 0.0
    %v233 = vmax.f32 %v225, 0.0
    %v234 = vmax.f32 %v227, 0.0
    %s235 = sld [smem:[#allocation4]]
    %s236 = scalar_lea.vmem %s3, %s235
    %v237 = vld [vmem:[%s236] sm:$0x1]
    %vm238 = vcmask 57344
    %239 = vst.msk [vmem:[#allocation2] sm:$0x1] %vm238, %v237
    %s240 = sld [smem:[#allocation4 + $0x1]]
    %s241 = scalar_lea.vmem %s3, %s240
    %v242 = vld [vmem:[%s241] sm:$0x1]
    %243 = vst.msk [vmem:[#allocation2 + $0x1] sm:$0x1] %vm238, %v242
    %s244 = sld [smem:[#allocation4 + $0x2]]
    %s245 = scalar_lea.vmem %s3, %s244
    %v246 = vld [vmem:[%s245] sm:$0x1]
    %247 = vst.msk [vmem:[#allocation2 + $0x2] sm:$0x1] %vm238, %v246
    %s248 = sld [smem:[#allocation4 + $0x3]]
    %s249 = scalar_lea.vmem %s3, %s248
    %v250 = vld [vmem:[%s249] sm:$0x1]
    %251 = vst.msk [vmem:[#allocation2 + $0x3] sm:$0x1] %vm238, %v250
    %s252 = sld [smem:[#allocation4 + $0x4]]
    %s253 = scalar_lea.vmem %s3, %s252
    %v254 = vld [vmem:[%s253] sm:$0x1]
    %255 = vst.msk [vmem:[#allocation2 + $0x4] sm:$0x1] %vm238, %v254
    %s256 = sld [smem:[#allocation4 + $0x5]]
    %s257 = scalar_lea.vmem %s3, %s256
    %v258 = vld [vmem:[%s257] sm:$0x1]
    %259 = vst.msk [vmem:[#allocation2 + $0x5] sm:$0x1] %vm238, %v258
    %s260 = sld [smem:[#allocation4 + $0x6]]
    %s261 = scalar_lea.vmem %s3, %s260
    %v262 = vld [vmem:[%s261] sm:$0x1]
    %263 = vst.msk [vmem:[#allocation2 + $0x6] sm:$0x1] %vm238, %v262
    %s264 = sld [smem:[#allocation4 + $0x7]]
    %s265 = scalar_lea.vmem %s3, %s264
    %v266 = vld [vmem:[%s265] sm:$0x1]
    %267 = vst.msk [vmem:[#allocation2 + $0x7] sm:$0x1] %vm238, %v266
    %s268 = sld [smem:[#allocation4 + $0x8]]
    %s269 = scalar_lea.vmem %s3, %s268
    %v270 = vld [vmem:[%s269] sm:$0x1]
    %271 = vst.msk [vmem:[#allocation2 + $0x8] sm:$0x1] %vm238, %v270
    %s272 = sld [smem:[#allocation4 + $0x9]]
    %s273 = scalar_lea.vmem %s3, %s272
    %v274 = vld [vmem:[%s273] sm:$0x1]
    %275 = vst.msk [vmem:[#allocation2 + $0x9] sm:$0x1] %vm238, %v274
    %s276 = sld [smem:[#allocation4 + $0xa]]
    %s277 = scalar_lea.vmem %s3, %s276
    %v278 = vld [vmem:[%s277] sm:$0x1]
    %279 = vst.msk [vmem:[#allocation2 + $0xa] sm:$0x1] %vm238, %v278
    %s280 = sld [smem:[#allocation4 + $0xb]]
    %s281 = scalar_lea.vmem %s3, %s280
    %v282 = vld [vmem:[%s281] sm:$0x1]
    %283 = vst.msk [vmem:[#allocation2 + $0xb] sm:$0x1] %vm238, %v282
    %s284 = sld [smem:[#allocation4 + $0xc]]
    %s285 = scalar_lea.vmem %s3, %s284
    %v286 = vld [vmem:[%s285] sm:$0x1]
    %287 = vst.msk [vmem:[#allocation2 + $0xc] sm:$0x1] %vm238, %v286
    %s288 = sld [smem:[#allocation4 + $0xd]]
    %s289 = scalar_lea.vmem %s3, %s288
    %v290 = vld [vmem:[%s289] sm:$0x1]
    %291 = vst.msk [vmem:[#allocation2 + $0xd] sm:$0x1] %vm238, %v290
    %s292 = sld [smem:[#allocation4 + $0xe]]
    %s293 = scalar_lea.vmem %s3, %s292
    %v294 = vld [vmem:[%s293] sm:$0x1]
    %295 = vst.msk [vmem:[#allocation2 + $0xe] sm:$0x1] %vm238, %v294
    %s296 = sld [smem:[#allocation4 + $0xf]]
    %s297 = scalar_lea.vmem %s3, %s296
    %v298 = vld [vmem:[%s297] sm:$0x1]
    %299 = vst.msk [vmem:[#allocation2 + $0xf] sm:$0x1] %vm238, %v298
    %s300 = sld [smem:[#allocation4 + $0x10]]
    %s301 = scalar_lea.vmem %s3, %s300
    %v302 = vld [vmem:[%s301] sm:$0x1]
    %303 = vst.msk [vmem:[#allocation2 + $0x10] sm:$0x1] %vm238, %v302
    %s304 = sld [smem:[#allocation4 + $0x11]]
    %s305 = scalar_lea.vmem %s3, %s304
    %v306 = vld [vmem:[%s305] sm:$0x1]
    %307 = vst.msk [vmem:[#allocation2 + $0x11] sm:$0x1] %vm238, %v306
    %s308 = sld [smem:[#allocation4 + $0x12]]
    %s309 = scalar_lea.vmem %s3, %s308
    %v310 = vld [vmem:[%s309] sm:$0x1]
    %311 = vst.msk [vmem:[#allocation2 + $0x12] sm:$0x1] %vm238, %v310
    %s312 = sld [smem:[#allocation4 + $0x13]]
    %s313 = scalar_lea.vmem %s3, %s312
    %v314 = vld [vmem:[%s313] sm:$0x1]
    %315 = vst.msk [vmem:[#allocation2 + $0x13] sm:$0x1] %vm238, %v314
    %s316 = sld [smem:[#allocation4 + $0x14]]
    %s317 = scalar_lea.vmem %s3, %s316
    %v318 = vld [vmem:[%s317] sm:$0x1]
    %319 = vst.msk [vmem:[#allocation2 + $0x14] sm:$0x1] %vm238, %v318
    %s320 = sld [smem:[#allocation4 + $0x15]]
    %s321 = scalar_lea.vmem %s3, %s320
    %v322 = vld [vmem:[%s321] sm:$0x1]
    %323 = vst.msk [vmem:[#allocation2 + $0x15] sm:$0x1] %vm238, %v322
    %s324 = sld [smem:[#allocation4 + $0x16]]
    %s325 = scalar_lea.vmem %s3, %s324
    %v326 = vld [vmem:[%s325] sm:$0x1]
    %327 = vst.msk [vmem:[#allocation2 + $0x16] sm:$0x1] %vm238, %v326
    %s328 = sld [smem:[#allocation4 + $0x17]]
    %s329 = scalar_lea.vmem %s3, %s328
    %v330 = vld [vmem:[%s329] sm:$0x1]
    %331 = vst.msk [vmem:[#allocation2 + $0x17] sm:$0x1] %vm238, %v330
    %s332 = sld [smem:[#allocation4 + $0x18]]
    %s333 = scalar_lea.vmem %s3, %s332
    %v334 = vld [vmem:[%s333] sm:$0x1]
    %335 = vst.msk [vmem:[#allocation2 + $0x18] sm:$0x1] %vm238, %v334
    %s336 = sld [smem:[#allocation4 + $0x19]]
    %s337 = scalar_lea.vmem %s3, %s336
    %v338 = vld [vmem:[%s337] sm:$0x1]
    %339 = vst.msk [vmem:[#allocation2 + $0x19] sm:$0x1] %vm238, %v338
    %s340 = sld [smem:[#allocation4 + $0x1a]]
    %s341 = scalar_lea.vmem %s3, %s340
    %v342 = vld [vmem:[%s341] sm:$0x1]
    %343 = vst.msk [vmem:[#allocation2 + $0x1a] sm:$0x1] %vm238, %v342
    %s344 = sld [smem:[#allocation4 + $0x1b]]
    %s345 = scalar_lea.vmem %s3, %s344
    %v346 = vld [vmem:[%s345] sm:$0x1]
    %347 = vst.msk [vmem:[#allocation2 + $0x1b] sm:$0x1] %vm238, %v346
    %s348 = sld [smem:[#allocation4 + $0x1c]]
    %s349 = scalar_lea.vmem %s3, %s348
    %v350 = vld [vmem:[%s349] sm:$0x1]
    %351 = vst.msk [vmem:[#allocation2 + $0x1c] sm:$0x1] %vm238, %v350
    %s352 = sld [smem:[#allocation4 + $0x1d]]
    %s353 = scalar_lea.vmem %s3, %s352
    %v354 = vld [vmem:[%s353] sm:$0x1]
    %355 = vst.msk [vmem:[#allocation2 + $0x1d] sm:$0x1] %vm238, %v354
    %s356 = sld [smem:[#allocation4 + $0x1e]]
    %s357 = scalar_lea.vmem %s3, %s356
    %v358 = vld [vmem:[%s357] sm:$0x1]
    %359 = vst.msk [vmem:[#allocation2 + $0x1e] sm:$0x1] %vm238, %v358
    %s360 = sld [smem:[#allocation4 + $0x1f]]
    %s361 = scalar_lea.vmem %s3, %s360
    %v362 = vld [vmem:[%s361] sm:$0x1]
    %363 = vst.msk [vmem:[#allocation2 + $0x1f] sm:$0x1] %vm238, %v362
    %s364 = sld [smem:[#allocation4 + $0x20]]
    %s365 = scalar_lea.vmem %s3, %s364
    %v366 = vld [vmem:[%s365] sm:$0x1]
    %367 = vst.msk [vmem:[#allocation2 + $0x20] sm:$0x1] %vm238, %v366
    %s368 = sld [smem:[#allocation4 + $0x21]]
    %s369 = scalar_lea.vmem %s3, %s368
    %v370 = vld [vmem:[%s369] sm:$0x1]
    %371 = vst.msk [vmem:[#allocation2 + $0x21] sm:$0x1] %vm238, %v370
    %s372 = sld [smem:[#allocation4 + $0x22]]
    %s373 = scalar_lea.vmem %s3, %s372
    %v374 = vld [vmem:[%s373] sm:$0x1]
    %375 = vst.msk [vmem:[#allocation2 + $0x22] sm:$0x1] %vm238, %v374
    %s376 = sld [smem:[#allocation4 + $0x23]]
    %s377 = scalar_lea.vmem %s3, %s376
    %v378 = vld [vmem:[%s377] sm:$0x1]
    %379 = vst.msk [vmem:[#allocation2 + $0x23] sm:$0x1] %vm238, %v378
    %s380 = sld [smem:[#allocation4 + $0x24]]
    %s381 = scalar_lea.vmem %s3, %s380
    %v382 = vld [vmem:[%s381] sm:$0x1]
    %383 = vst.msk [vmem:[#allocation2 + $0x24] sm:$0x1] %vm238, %v382
    %s384 = sld [smem:[#allocation4 + $0x25]]
    %s385 = scalar_lea.vmem %s3, %s384
    %v386 = vld [vmem:[%s385] sm:$0x1]
    %387 = vst.msk [vmem:[#allocation2 + $0x25] sm:$0x1] %vm238, %v386
    %s388 = sld [smem:[#allocation4 + $0x26]]
    %s389 = scalar_lea.vmem %s3, %s388
    %v390 = vld [vmem:[%s389] sm:$0x1]
    %391 = vst.msk [vmem:[#allocation2 + $0x26] sm:$0x1] %vm238, %v390
    %s392 = sld [smem:[#allocation4 + $0x27]]
    %s393 = scalar_lea.vmem %s3, %s392
    %v394 = vld [vmem:[%s393] sm:$0x1]
    %395 = vst.msk [vmem:[#allocation2 + $0x27] sm:$0x1] %vm238, %v394
    %s396 = sld [smem:[#allocation4 + $0x28]]
    %s397 = scalar_lea.vmem %s3, %s396
    %v398 = vld [vmem:[%s397] sm:$0x1]
    %399 = vst.msk [vmem:[#allocation2 + $0x28] sm:$0x1] %vm238, %v398
    %s400 = sld [smem:[#allocation4 + $0x29]]
    %s401 = scalar_lea.vmem %s3, %s400
    %v402 = vld [vmem:[%s401] sm:$0x1]
    %403 = vst.msk [vmem:[#allocation2 + $0x29] sm:$0x1] %vm238, %v402
    %s404 = sld [smem:[#allocation4 + $0x2a]]
    %s405 = scalar_lea.vmem %s3, %s404
    %v406 = vld [vmem:[%s405] sm:$0x1]
    %407 = vst.msk [vmem:[#allocation2 + $0x2a] sm:$0x1] %vm238, %v406
    %s408 = sld [smem:[#allocation4 + $0x2b]]
    %s409 = scalar_lea.vmem %s3, %s408
    %v410 = vld [vmem:[%s409] sm:$0x1]
    %411 = vst.msk [vmem:[#allocation2 + $0x2b] sm:$0x1] %vm238, %v410
    %s412 = sld [smem:[#allocation4 + $0x2c]]
    %s413 = scalar_lea.vmem %s3, %s412
    %v414 = vld [vmem:[%s413] sm:$0x1]
    %415 = vst.msk [vmem:[#allocation2 + $0x2c] sm:$0x1] %vm238, %v414
    %s416 = sld [smem:[#allocation4 + $0x2d]]
    %s417 = scalar_lea.vmem %s3, %s416
    %v418 = vld [vmem:[%s417] sm:$0x1]
    %419 = vst.msk [vmem:[#allocation2 + $0x2d] sm:$0x1] %vm238, %v418
    %s420 = sld [smem:[#allocation4 + $0x2e]]
    %s421 = scalar_lea.vmem %s3, %s420
    %v422 = vld [vmem:[%s421] sm:$0x1]
    %423 = vst.msk [vmem:[#allocation2 + $0x2e] sm:$0x1] %vm238, %v422
    %s424 = sld [smem:[#allocation4 + $0x2f]]
    %s425 = scalar_lea.vmem %s3, %s424
    %v426 = vld [vmem:[%s425] sm:$0x1]
    %427 = vst.msk [vmem:[#allocation2 + $0x2f] sm:$0x1] %vm238, %v426
    %v428 = vld [vmem:[#allocation2] sm:$0xff]
    %v429 = vld [vmem:[#allocation2 + $0x8] sm:$0xff]
    %v430 = vld [vmem:[#allocation2 + $0x10] sm:$0xff]
    %v431 = vld [vmem:[#allocation2 + $0x18] sm:$0xff]
    %v432 = vld [vmem:[#allocation2 + $0x20] sm:$0xff]
    %v433 = vld [vmem:[#allocation2 + $0x28] sm:$0xff]
    %435 = vset.pattern.permute.xlu0 0
    %436 = vperm.xlu0 %435, %v229
    %v437 = vpop.permute.xlu0 %436
    %440 = vset.pattern.permute.xlu0 0
    %441 = vperm.xlu0 %440, %v230
    %v442 = vpop.permute.xlu0 %441
    %445 = vset.pattern.permute.xlu0 0
    %446 = vperm.xlu0 %445, %v231
    %v447 = vpop.permute.xlu0 %446
    %450 = vset.pattern.permute.xlu0 0
    %451 = vperm.xlu0 %450, %v232
    %v452 = vpop.permute.xlu0 %451
    %455 = vset.pattern.permute.xlu0 0
    %456 = vperm.xlu0 %455, %v233
    %v457 = vpop.permute.xlu0 %456
    %460 = vset.pattern.permute.xlu0 0
    %461 = vperm.xlu0 %460, %v234
    %v462 = vpop.permute.xlu0 %461
    %v464 = vmul.f32 %v437, %v428
    %v465 = vmul.f32 %v442, %v429
    %v466 = vmul.f32 %v447, %v430
    %v467 = vmul.f32 %v452, %v431
    %v468 = vmul.f32 %v457, %v432
    %v469 = vmul.f32 %v462, %v433
    %470 = vset.pattern.permute.xlu0 1
    %471 = vperm.xlu0 %470, %v229
    %v472 = vpop.permute.xlu0 %471
    %474 = vset.pattern.permute.xlu0 1
    %475 = vperm.xlu0 %474, %v230
    %v476 = vpop.permute.xlu0 %475
    %478 = vset.pattern.permute.xlu0 1
    %479 = vperm.xlu0 %478, %v231
    %v480 = vpop.permute.xlu0 %479
    %482 = vset.pattern.permute.xlu0 1
    %483 = vperm.xlu0 %482, %v232
    %v484 = vpop.permute.xlu0 %483
    %486 = vset.pattern.permute.xlu0 1
    %487 = vperm.xlu0 %486, %v233
    %v488 = vpop.permute.xlu0 %487
    %490 = vset.pattern.permute.xlu0 1
    %491 = vperm.xlu0 %490, %v234
    %v492 = vpop.permute.xlu0 %491
    %v494 = vmul.f32 %v472, %v428
    %v495 = vmul.f32 %v476, %v429
    %v496 = vmul.f32 %v480, %v430
    %v497 = vmul.f32 %v484, %v431
    %v498 = vmul.f32 %v488, %v432
    %v499 = vmul.f32 %v492, %v433
    %500 = vset.pattern.permute.xlu0 2
    %501 = vperm.xlu0 %500, %v229
    %v502 = vpop.permute.xlu0 %501
    %504 = vset.pattern.permute.xlu0 2
    %505 = vperm.xlu0 %504, %v230
    %v506 = vpop.permute.xlu0 %505
    %508 = vset.pattern.permute.xlu0 2
    %509 = vperm.xlu0 %508, %v231
    %v510 = vpop.permute.xlu0 %509
    %512 = vset.pattern.permute.xlu0 2
    %513 = vperm.xlu0 %512, %v232
    %v514 = vpop.permute.xlu0 %513
    %516 = vset.pattern.permute.xlu0 2
    %517 = vperm.xlu0 %516, %v233
    %v518 = vpop.permute.xlu0 %517
    %520 = vset.pattern.permute.xlu0 2
    %521 = vperm.xlu0 %520, %v234
    %v522 = vpop.permute.xlu0 %521
    %v524 = vmul.f32 %v502, %v428
    %v525 = vmul.f32 %v506, %v429
    %v526 = vmul.f32 %v510, %v430
    %v527 = vmul.f32 %v514, %v431
    %v528 = vmul.f32 %v518, %v432
    %v529 = vmul.f32 %v522, %v433
    %530 = vset.pattern.permute.xlu0 3
    %531 = vperm.xlu0 %530, %v229
    %v532 = vpop.permute.xlu0 %531
    %534 = vset.pattern.permute.xlu0 3
    %535 = vperm.xlu0 %534, %v230
    %v536 = vpop.permute.xlu0 %535
    %538 = vset.pattern.permute.xlu0 3
    %539 = vperm.xlu0 %538, %v231
    %v540 = vpop.permute.xlu0 %539
    %542 = vset.pattern.permute.xlu0 3
    %543 = vperm.xlu0 %542, %v232
    %v544 = vpop.permute.xlu0 %543
    %546 = vset.pattern.permute.xlu0 3
    %547 = vperm.xlu0 %546, %v233
    %v548 = vpop.permute.xlu0 %547
    %550 = vset.pattern.permute.xlu0 3
    %551 = vperm.xlu0 %550, %v234
    %v552 = vpop.permute.xlu0 %551
    %v554 = vmul.f32 %v532, %v428
    %v555 = vmul.f32 %v536, %v429
    %v556 = vmul.f32 %v540, %v430
    %v557 = vmul.f32 %v544, %v431
    %v558 = vmul.f32 %v548, %v432
    %v559 = vmul.f32 %v552, %v433
    %566 = vrot.lane.b32.xlu0 %v494, 8
    %v567 = vpop.permute.xlu0 %566
    %568 = vrot.lane.b32.xlu0 %v495, 8
    %v569 = vpop.permute.xlu0 %568
    %570 = vrot.lane.b32.xlu0 %v496, 8
    %v571 = vpop.permute.xlu0 %570
    %572 = vrot.lane.b32.xlu0 %v497, 8
    %v573 = vpop.permute.xlu0 %572
    %574 = vrot.lane.b32.xlu0 %v498, 8
    %v575 = vpop.permute.xlu0 %574
    %576 = vrot.lane.b32.xlu0 %v499, 8
    %v577 = vpop.permute.xlu0 %576
    %590 = vrot.lane.b32.xlu0 %v524, 16
    %v591 = vpop.permute.xlu0 %590
    %592 = vrot.lane.b32.xlu0 %v525, 16
    %v593 = vpop.permute.xlu0 %592
    %594 = vrot.lane.b32.xlu0 %v526, 16
    %v595 = vpop.permute.xlu0 %594
    %596 = vrot.lane.b32.xlu0 %v527, 16
    %v597 = vpop.permute.xlu0 %596
    %598 = vrot.lane.b32.xlu0 %v528, 16
    %v599 = vpop.permute.xlu0 %598
    %600 = vrot.lane.b32.xlu0 %v529, 16
    %v601 = vpop.permute.xlu0 %600
    %614 = vrot.lane.b32.xlu0 %v554, 24
    %v615 = vpop.permute.xlu0 %614
    %616 = vrot.lane.b32.xlu0 %v555, 24
    %v617 = vpop.permute.xlu0 %616
    %618 = vrot.lane.b32.xlu0 %v556, 24
    %v619 = vpop.permute.xlu0 %618
    %620 = vrot.lane.b32.xlu0 %v557, 24
    %v621 = vpop.permute.xlu0 %620
    %622 = vrot.lane.b32.xlu0 %v558, 24
    %v623 = vpop.permute.xlu0 %622
    %624 = vrot.lane.b32.xlu0 %v559, 24
    %v625 = vpop.permute.xlu0 %624
    %v632 = vsel %vm155, %v464, %v567
    %v633 = vsel %vm155, %v465, %v569
    %v634 = vsel %vm155, %v466, %v571
    %v635 = vsel %vm155, %v467, %v573
    %v636 = vsel %vm155, %v468, %v575
    %v637 = vsel %vm155, %v469, %v577
    %vm638 = vcmask 130048
    %v639 = vsel %vm638, %v632, %v591
    %v640 = vsel %vm638, %v633, %v593
    %v641 = vsel %vm638, %v634, %v595
    %v642 = vsel %vm638, %v635, %v597
    %v643 = vsel %vm638, %v636, %v599
    %v644 = vsel %vm638, %v637, %v601
    %vm645 = vcmask 195584
    %v646 = vsel %vm645, %v639, %v615
    %v647 = vsel %vm645, %v640, %v617
    %v648 = vsel %vm645, %v641, %v619
    %v649 = vsel %vm645, %v642, %v621
    %v650 = vsel %vm645, %v643, %v623
    %v651 = vsel %vm645, %v644, %v625
    %v652 = vpack.c.bf16 %v647, %v646
    %v653 = vpack.c.bf16 %v649, %v648
    %v654 = vpack.c.bf16 %v651, %v650
    %v655 = vld [vmem:[%s7] sm:$0xf]
    %v656 = vld [vmem:[%s7 + $0x4] sm:$0xf]
    %v657 = vld [vmem:[%s7 + $0x8] sm:$0xf]
    %v658 = vld [vmem:[%s7 + $0xc] sm:$0xf]
    %v663 = vunpack.c.l.b16 %v655
    %v664 = vunpack.c.l.b16 %v656
    %v665 = vunpack.c.l.b16 %v657
    %v666 = vunpack.c.l.b16 %v658
    %v667 = vpack.c.b16 %v664, %v663
    %v668 = vpack.c.b16 %v666, %v665
    %vm671 = vcmask 261120
    %v673 = vsel %vm671, %v652, 0
    %v676 = vsel %vm671, %v653, 0
    %v679 = vsel %vm671, %v654, 0
    %681 = vmatpush.bf16.msra.mxu0 0
    %682 = vmatpush.bf16.msra.mxu0 0
    %683 = vmatpush.bf16.msra.mxu0 0
    %684 = vmatpush.bf16.msra.mxu0 0
    %685 = vmatpush.bf16.msra.mxu0 0
    %686 = vmatpush.bf16.msra.mxu0 0
    %687 = vmatpush.bf16.msra.mxu0 %v668
    %688 = vmatpush.bf16.msra.mxu0 %v667
    %689 = vmatmul.bf16.gmra.mxu0 %v673
    %v690 = vpop.f32.mrf.mxu0
    %v691 = vadd.f32 0.0, %v690
    %v692 = vpop.f32.mrf.mxu0
    %v693 = vadd.f32 0.0, %v692
    %694 = vmatmul.bf16.gmra.mxu0 %v676
    %v695 = vpop.f32.mrf.mxu0
    %v696 = vadd.f32 0.0, %v695
    %v697 = vpop.f32.mrf.mxu0
    %v698 = vadd.f32 0.0, %v697
    %699 = vmatmul.bf16.gmra.mxu0 %v679
    %v700 = vpop.f32.mrf.mxu0
    %v701 = vadd.f32 0.0, %v700
    %v702 = vpop.f32.mrf.mxu0
    %v703 = vadd.f32 0.0, %v702
    %704 = vdwg.mxu0
    %v705 = vld [vmem:[%s1] sm:$0x1]
    %v706 = vlaneseq
    %v707 = vshrl.u32 %v706, 7
    %v708 = vadd.s32 %v707, 8
    %v709 = vperm.slane %v705, 0
    %vm710 = vcmp.eq.s32.totalorder %v707, %v709
    %vm711 = vcmp.eq.s32.totalorder %v708, %v709
    %v712 = vsel %vm710, 1, 0
    %v713 = vsel %vm711, 1, 0
    %v714 = vcvt.s32.f32 %v712
    %v715 = vcvt.s32.f32 %v713
    %v716 = vpack.c.bf16 %v715, %v714
    %v717 = vpack.c.bf16 %v693, %v691
    %v718 = vpack.c.bf16 %v698, %v696
    %v719 = vpack.c.bf16 %v703, %v701
    %v720 = vld [vmem:[%s8] sm:$0x1]
    %v722 = vperm.slane %v720, 0
    %vm724 = vcmask 392192
    %v726 = vsel %vm724, %v716, 0
    %728 = vmatpush.bf16.msra.mxu0 0
    %729 = vmatpush.bf16.msra.mxu0 0
    %730 = vmatpush.bf16.msra.mxu0 0
    %731 = vmatpush.bf16.msra.mxu0 0
    %732 = vmatpush.bf16.msra.mxu0 0
    %733 = vmatpush.bf16.msra.mxu0 %v719
    %734 = vmatpush.bf16.msra.mxu0 %v718
    %735 = vmatpush.bf16.msra.mxu0 %v717
    %736 = vmatmul.bf16.gmra.mxu0 %v726
    %v737 = vpop.f32.mrf.mxu0
    %v738 = vadd.f32 %v722, %v737
    %v739 = vpop.f32.mrf.mxu0
    %v740 = vadd.f32 %v722, %v739
    %741 = vdwg.mxu0
    %v742 = vmax.f32 %v738, 0.0
    %v743 = vmax.f32 %v740, 0.0
    %v744 = vpack.c.bf16 %v47, %v46
    %v745 = vld [vmem:[%s9] sm:$0xf]
    %v746 = vld [vmem:[%s10] sm:$0x1]
    %v748 = vperm.slane %v746, 0
    %v751 = vsel %vm155, %v744, 0
    %v754 = vsel %vm165, %v745, 0
    %756 = vmatpush.bf16.msra.mxu0 0
    %757 = vmatpush.bf16.msra.mxu0 0
    %758 = vmatpush.bf16.msra.mxu0 0
    %759 = vmatpush.bf16.msra.mxu0 0
    %760 = vmatpush.bf16.msra.mxu0 0
    %761 = vmatpush.bf16.msra.mxu0 0
    %762 = vmatpush.bf16.msra.mxu0 0
    %763 = vmatpush.bf16.msra.mxu0 %v754
    %764 = vmatmul.bf16.gmra.mxu0 %v751
    %v765 = vpop.f32.mrf.mxu0
    %v766 = vadd.f32 %v748, %v765
    %v767 = vpop.f32.mrf.mxu0
    %v768 = vadd.f32 %v748, %v767
    %769 = vdwg.mxu0
    %v770 = vtanh.pop %v766
    %v771 = vtanh.pop %v768
    %774 = vrot.lane.b32.xlu0 %v770, 126
    %v775 = vpop.permute.xlu0 %774
    %776 = vrot.lane.b32.xlu0 %v771, 126
    %v777 = vpop.permute.xlu0 %776
    %v780 = vmul.f32 %v770, %v775
    %v781 = vmul.f32 %v771, %v777
    %784 = vrot.lane.b32.xlu0 %v780, 16
    %v785 = vpop.permute.xlu0 %784
    %786 = vrot.lane.b32.xlu0 %v781, 16
    %v787 = vpop.permute.xlu0 %786
    %v790 = vsel %vm638, %v742, %v785
    %v791 = vsel %vm638, %v743, %v787
    %vm792 = vcmask 146432
    %793 = vst.msk [vmem:[#allocation5] sm:$0xff] %vm792, %v790
    %794 = vst.msk [vmem:[#allocation5 + $0x8] sm:$0xff] %vm792, %v791
    // Predicated region
    $region42: #{tpu_custom_call.1} parent=1 // pred_check
      _
    $region43: #{tpu_custom_call.1} parent=1 // pred_check_branch
      %796 = sbr.rel (0) target = $region45
    $region44: #{tpu_custom_call.1} parent=1 // pred_region
      %798 = vsyncadd [#allocation6], 0
      %s799 = sshll.u32 [#allocation5], 4
      %s800 = int_to_ptr.vmem [resolvable:$true] %s799
      %s801 = sshll.u32 %s11, 4
      %s802 = int_to_ptr.hbm [resolvable:$true] %s801
      %807 = dma.vmem_to_hbm [thread:$0]  %s800, 256, %s802, [#allocation6], 128, 128, 8
    $region45: #{tpu_custom_call.1} parent=1 // pred_fallthru
      _
    // Predicated region
    $region46: #{tpu_custom_call.1} parent=1 // pred_check
      _
    $region47: #{tpu_custom_call.1} parent=1 // pred_check_branch
      %809 = sbr.rel (0) target = $region49
    $region48: #{tpu_custom_call.1} parent=1 // pred_region
      %811 = dma.done [#allocation6], 256
    $region49: #{tpu_custom_call.1} parent=1 // pred_fallthru
      _
    %812 = vsyncpa [#allocation6], 1

</llo_original>
